<compile_context>
chip_gen: v6e
topology: v6e:2x2x1
jax: 0.10.0
libtpu: 0.0.40
codegen_flags: <defaults>
</compile_context>

<pallas_src>
import jax
import jax.numpy as jnp
import numpy as np
from jax import lax
from jax.experimental import pallas as pl
from jax.experimental.pallas import tpu as pltpu


# --------------------------------------------------------------------------------------
# small helpers
# --------------------------------------------------------------------------------------
def _ceil_to(a, m):
    return -(-a // m) * m


def _vmem_capacity_bytes():
    """Generation-aware VMEM capacity; falls back to the v7x-safe 64 MiB."""
    try:
        info = pltpu.get_tpu_info()
        cap = getattr(info, "vmem_capacity_bytes", None)
        if cap:
            return int(cap)
    except Exception:
        pass
    return 64 << 20


def _for_each_group(n_groups, body, *, unroll_limit=32):
    """Run body(k) for k in [0, n_groups): unrolled when short (LLO visibility), scf.for else."""
    if n_groups <= 0:
        return
    if n_groups <= unroll_limit:
        for k in range(n_groups):
            body(k)
    else:
        @pl.loop(0, n_groups)
        def _(k):
            body(k)


def _group_start(k):
    off = k * 128
    if isinstance(off, int):
        return off
    return pl.multiple_of(off, 128)


def _pick_tiles(rows, S, itemsize, block_budget, *, max_rows=None, max_chunk=None,
                chunk_ceiling=None):
    """Pick (row_tile, lane_chunk): row_tile % 8 == 0 (or == rows), lane_chunk % 128 == 0,
    sized so one block stays under block_budget (best effort)."""
    s_pad = _ceil_to(S, 128)
    chunk_cap = s_pad
    if chunk_ceiling is not None:
        chunk_cap = min(chunk_cap, chunk_ceiling)
    if max_chunk is not None:
        chunk_cap = min(chunk_cap, _ceil_to(max_chunk, 128))
    chunk_cap = max(chunk_cap, 128)

    if rows <= 8:
        rt = rows                      # block dim equal to full array dim is always legal
    else:
        cap = rows if max_rows is None else min(rows, max(8, max_rows))
        rt = min(_ceil_to(cap, 8), _ceil_to(rows, 8), 1024)
        while rt > 8 and rt * 128 * itemsize > block_budget:
            rt = max(8, ((rt // 2 + 7) // 8) * 8)

    fit = (block_budget // max(1, rt * itemsize)) // 128 * 128
    chunk = max(128, min(chunk_cap, fit))
    return rt, chunk


# --------------------------------------------------------------------------------------
# fused (VMEM-resident) kernel: reduce + MLP + sigmoid + multiply, single launch
# --------------------------------------------------------------------------------------
def _make_fused_kernel(B, F, S):
    n_full = S // 128
    rem = S - n_full * 128
    inv_s = 1.0 / float(S)

    def kernel(x_ref, w1_ref, b1_ref, w2_ref, b2_ref, o_ref, sum_acc, min_acc):
        sum_acc[...] = jnp.zeros(sum_acc.shape, jnp.float32)
        min_acc[...] = jnp.full(min_acc.shape, jnp.inf, jnp.float32)

        # ---- lane-group reduction (VALU-only hot loop, accumulators stay in VMEM) ----
        def reduce_group(k):
            idx = pl.ds(_group_start(k), 128)
            xs = x_ref[:, :, idx].astype(jnp.float32)          # (B, F, 128)
            sum_acc[...] += xs
            min_acc[...] = jnp.minimum(min_acc[...], xs)

        _for_each_group(n_full, reduce_group)
        if rem:                                                # static sub-128 lane tail
            xs = x_ref[:, :, n_full * 128:S].astype(jnp.float32)
            sum_acc[:, :, :rem] += xs
            min_acc[:, :, :rem] = jnp.minimum(min_acc[:, :, :rem], xs)

        avg = jnp.sum(sum_acc[...], axis=-1) * inv_s           # (B, F) == adaptive_avg_pool3d
        mn = jnp.min(min_acc[...], axis=-1)                    # (B, F) == -adaptive_max_pool3d(-x)

        # ---- shared-weight MLP on both pooled vectors, fused into one matmul chain ----
        stacked = jnp.concatenate([avg, mn], axis=0)           # (2B, F)
        h = jnp.maximum(jnp.dot(stacked, w1_ref[...],
                                preferred_element_type=jnp.float32) + b1_ref[...], 0.0)
        o = jnp.dot(h, w2_ref[...], preferred_element_type=jnp.float32) + b2_ref[...]
        gate = jax.nn.sigmoid(o[:B] + o[B:])[:, :, None]       # (B, F, 1), f32
        gate_b = jnp.broadcast_to(gate, (B, F, 128))           # hoisted lane broadcast

        # ---- gated multiply streamed back out (x is still VMEM-resident) ----
        def mul_group(k):
            idx = pl.ds(_group_start(k), 128)
            o_ref[:, :, idx] = (x_ref[:, :, idx].astype(jnp.float32) * gate_b
                                ).astype(o_ref.dtype)

        _for_each_group(n_full, mul_group)
        if rem:
            o_ref[:, :, n_full * 128:S] = (
                x_ref[:, :, n_full * 128:S].astype(jnp.float32) * gate_b[:, :, :rem]
            ).astype(o_ref.dtype)

    return kernel


# --------------------------------------------------------------------------------------
# streaming pass 1: per-row sum & min over lane-dense chunks (no pad, tail masked in-kernel)
# --------------------------------------------------------------------------------------
def _make_reduce_kernel(S, chunk):
    n_groups = chunk // 128
    ragged_tail = (S % chunk) != 0

    def kernel(x_ref, sum_ref, min_ref, sum_acc, min_acc):
        c = pl.program_id(1)
        nc = pl.num_programs(1)

        @pl.when(c == 0)
        def _():
            sum_acc[...] = jnp.zeros(sum_acc.shape, jnp.float32)
            min_acc[...] = jnp.full(min_acc.shape, jnp.inf, jnp.float32)

        def accumulate(masked):
            def group(k):
                off = k * 128
                idx = pl.ds(_group_start(k), 128)
                xs = x_ref[:, idx].astype(jnp.float32)          # (rows_tile, 128)
                if masked:
                    lane = lax.broadcasted_iota(jnp.int32, xs.shape, 1)
                    valid = (c * chunk + off + lane) < S
                    xs_sum = jnp.where(valid, xs, 0.0)
                    xs_min = jnp.where(valid, xs, jnp.inf)
                else:
                    xs_sum = xs
                    xs_min = xs
                sum_acc[...] += xs_sum
                min_acc[...] = jnp.minimum(min_acc[...], xs_min)

            _for_each_group(n_groups, group)

        if ragged_tail:
            # Mask only the tail chunk; all other steps stay a pure unmasked stream.
            @pl.when(c == nc - 1)
            def _():
                accumulate(True)

            @pl.when(c < nc - 1)
            def _():
                accumulate(False)
        else:
            accumulate(False)

        @pl.when(c == nc - 1)
        def _():
            # Single cross-lane (XLU) reduce per row tile, outside the hot loop.
            sum_ref[...] = jnp.sum(sum_acc[...], axis=-1, keepdims=True)
            min_ref[...] = jnp.min(min_acc[...], axis=-1, keepdims=True)

    return kernel


# --------------------------------------------------------------------------------------
# streaming pass 2: out = x * gate (pure vld -> vmul -> vst, lane-broadcast gate)
# --------------------------------------------------------------------------------------
def _mul_kernel(gate_ref, x_ref, o_ref):
    o_ref[...] = (x_ref[...].astype(jnp.float32) * gate_ref[...]).astype(o_ref.dtype)


# --------------------------------------------------------------------------------------
# wrapper
# --------------------------------------------------------------------------------------
def channel_attention_3d(x, w1, b1, w2, b2, *, fuse=None, max_rows=None, max_chunk=None):
    """x: (B, F, D, W, H). w1: (F, Fr), b1: (Fr,), w2: (Fr, F), b2: (F,). Returns x * gate."""
    B, F, D, W, H = x.shape
    S = D * W * H
    rows = B * F
    Fr = w1.shape[1]
    itemsize = jnp.dtype(x.dtype).itemsize
    x_bytes = rows * S * itemsize
    w_bytes = (F * Fr + Fr + Fr * F + F) * 4

    vmem_cap = _vmem_capacity_bytes()
    usable = (vmem_cap * 5) // 8            # ~40 MiB on v7x, ~80 MiB on v5e/v6e
    vmem_limit = int(usable)

    # ------------- fused fast path: whole activation resident in VMEM (2x|x| HBM traffic) -------------
    fused_need = 2 * x_bytes + 2 * rows * 128 * 4 + w_bytes + (2 << 20)
    use_fused = fuse if fuse is not None else (fused_need <= (usable * 3) // 4)
    if use_fused:
        x3 = x.reshape(B, F, S)
        vmem_spec = pl.BlockSpec(memory_space=pltpu.MemorySpace.VMEM)
        out3 = pl.pallas_call(
            _make_fused_kernel(B, F, S),
            out_shape=jax.ShapeDtypeStruct((B, F, S), x.dtype),
            in_specs=[vmem_spec] * 5,
            out_specs=vmem_spec,
            scratch_shapes=[pltpu.VMEM((B, F, 128), jnp.float32),
                            pltpu.VMEM((B, F, 128), jnp.float32)],
            compiler_params=pltpu.CompilerParams(vmem_limit_bytes=vmem_limit),
            cost_estimate=pl.CostEstimate(
                flops=3 * rows * S + 8 * B * F * Fr,
                transcendentals=rows,
                bytes_accessed=2 * x_bytes + w_bytes),
        )(x3, w1, b1.reshape(1, Fr), w2, b2.reshape(1, F))
        return out3.reshape(B, F, D, W, H)

    # ------------- streaming path -------------
    x2d = x.reshape(rows, S)                 # free, contiguous reshape (no HBM copy)

    # Pass 1 (reduce): only the x block is double-buffered -> bigger chunks than pass 2.
    budget1 = max(1 << 20, (usable - (4 << 20)) // 2)
    rt1, chunk1 = _pick_tiles(rows, S, itemsize, budget1,
                              max_rows=max_rows, max_chunk=max_chunk, chunk_ceiling=8192)
    grid1 = (pl.cdiv(rows, rt1), pl.cdiv(S, chunk1))

    sum_out, min_out = pl.pallas_call(
        _make_reduce_kernel(S, chunk1),
        out_shape=(jax.ShapeDtypeStruct((rows, 1), jnp.float32),
                   jax.ShapeDtypeStruct((rows, 1), jnp.float32)),
        grid_spec=pltpu.PrefetchScalarGridSpec(
            num_scalar_prefetch=0,
            grid=grid1,
            in_specs=[pl.BlockSpec((rt1, chunk1), lambda r, c: (r, c))],
            out_specs=(pl.BlockSpec((rt1, 1), lambda r, c: (r, 0)),
                       pl.BlockSpec((rt1, 1), lambda r, c: (r, 0))),
            scratch_shapes=[pltpu.VMEM((rt1, 128), jnp.float32),   # lane-partial running sum
                            pltpu.VMEM((rt1, 128), jnp.float32)],  # lane-partial running min
        ),
        compiler_params=pltpu.CompilerParams(
            dimension_semantics=("parallel", "arbitrary"),
            vmem_limit_bytes=vmem_limit),
        cost_estimate=pl.CostEstimate(
            flops=2 * rows * S, transcendentals=0,
            bytes_accessed=x_bytes + rows * 8),
    )(x2d)

    # Tiny shared-weight MLP + sigmoid in plain JAX (a few KFLOPs); keeping it out of the kernel
    # is what lets the reduction grid shard its row axis across TensorCores.
    avg = sum_out.reshape(B, F) * (1.0 / float(S))
    mn = min_out.reshape(B, F)

    def mlp(v):
        h = jnp.maximum(v @ w1.astype(jnp.float32) + b1.astype(jnp.float32), 0.0)
        return h @ w2.astype(jnp.float32) + b2.astype(jnp.float32)

    gate2d = jax.nn.sigmoid(mlp(avg) + mlp(mn)).reshape(rows, 1).astype(jnp.float32)

    # Pass 2 (gated multiply): in + out double-buffered -> 4 live blocks.
    budget2 = max(1 << 20, (usable - (4 << 20)) // 4)
    rt2, chunk2 = _pick_tiles(rows, S, itemsize, budget2,
                              max_rows=max_rows, max_chunk=max_chunk)
    grid2 = (pl.cdiv(rows, rt2), pl.cdiv(S, chunk2))

    out2d = pl.pallas_call(
        _mul_kernel,
        out_shape=jax.ShapeDtypeStruct((rows, S), x.dtype),
        grid_spec=pltpu.PrefetchScalarGridSpec(
            num_scalar_prefetch=0,
            grid=grid2,
            in_specs=[pl.BlockSpec((rt2, 1), lambda r, c: (r, 0)),      # lane-broadcast gate
                      pl.BlockSpec((rt2, chunk2), lambda r, c: (r, c))],
            out_specs=pl.BlockSpec((rt2, chunk2), lambda r, c: (r, c)),
        ),
        compiler_params=pltpu.CompilerParams(
            dimension_semantics=("parallel", "parallel"),
            vmem_limit_bytes=vmem_limit),
        cost_estimate=pl.CostEstimate(
            flops=rows * S, transcendentals=0,
            bytes_accessed=2 * x_bytes + rows * 4),
    )(gate2d, x2d)

    return out2d.reshape(B, F, D, W, H)


# --------------------------------------------------------------------------------------
# reference / test
# --------------------------------------------------------------------------------------
def _init_linear(key, fan_in, fan_out):
    # Deterministic init mimicking torch.nn.Linear default (uniform +/- 1/sqrt(fan_in)).
    kw, kb = jax.random.split(key)
    bound = 1.0 / np.sqrt(fan_in)
    # Stored as (fan_in, fan_out) so the kernel does v @ w (== v @ W.T in torch terms).
    w = jax.random.uniform(kw, (fan_in, fan_out), jnp.float32, -bound, bound)
    b = jax.random.uniform(kb, (fan_out,), jnp.float32, -bound, bound)
    return w, b


def _reference(x, w1, b1, w2, b2):
    avg = jnp.mean(x, axis=(2, 3, 4))
    mn = jnp.min(x, axis=(2, 3, 4))

    def mlp(v):
        h = jnp.maximum(v @ w1 + b1, 0.0)
        return h @ w2 + b2

    gate = jax.nn.sigmoid(mlp(avg) + mlp(mn))
    return x * gate[:, :, None, None, None]


if __name__ == "__main__":
    key = jax.random.PRNGKey(0)
    kx1, kx2, k1, k2 = jax.random.split(key, 4)

    B, F = 2, 32
    reduction = 16
    Fr = F // reduction  # = 2
    w1, b1 = _init_linear(k1, F, Fr)
    w2, b2 = _init_linear(k2, Fr, F)

    # Case 1: even spatial extent (S = 4*16*16 = 1024) -> fused VMEM-resident path.
    x1 = jax.random.normal(kx1, (B, F, 4, 16, 16), jnp.float32)
    out1 = jax.block_until_ready(channel_attention_3d(x1, w1, b1, w2, b2))
    ref1 = _reference(x1, w1, b1, w2, b2)
    assert out1.shape == x1.shape
    assert np.allclose(np.asarray(out1), np.asarray(ref1), atol=1e-5, rtol=1e-5)

    # Case 2: odd spatial extent (S = 3*5*7 = 105) -> fused path with a sub-128 lane tail.
    x2 = jax.random.normal(kx2, (B, F, 3, 5, 7), jnp.float32)
    out2 = jax.block_until_ready(channel_attention_3d(x2, w1, b1, w2, b2))
    ref2 = _reference(x2, w1, b1, w2, b2)
    assert out2.shape == x2.shape
    assert np.allclose(np.asarray(out2), np.asarray(ref2), atol=1e-5, rtol=1e-5)

    # Case 3/4: force the two-pass streaming path with small tiles so the multi-chunk
    # accumulation, row tiling, and ragged-tail masking are all exercised.
    out3 = jax.block_until_ready(
        channel_attention_3d(x1, w1, b1, w2, b2, fuse=False, max_rows=32, max_chunk=256))
    assert np.allclose(np.asarray(out3), np.asarray(ref1), atol=1e-5, rtol=1e-5)

    out4 = jax.block_until_ready(
        channel_attention_3d(x2, w1, b1, w2, b2, fuse=False, max_rows=32, max_chunk=256))
    assert np.allclose(np.asarray(out4), np.asarray(ref2), atol=1e-5, rtol=1e-5)

    print("KERNEL_OK")
</pallas_src>

<mosaic_0001>
module attributes {stable_mosaic.version = 11 : i64} {
  func.func @kernel(%arg0: memref<2x32x1024xf32, #tpu.memory_space<vmem>>, %arg1: memref<32x2xf32, #tpu.memory_space<vmem>>, %arg2: memref<1x2xf32, #tpu.memory_space<vmem>>, %arg3: memref<2x32xf32, #tpu.memory_space<vmem>>, %arg4: memref<1x32xf32, #tpu.memory_space<vmem>>, %arg5: memref<2x32x1024xf32, #tpu.memory_space<vmem>>, %arg6: memref<2x32x128xf32, #tpu.memory_space<vmem>>, %arg7: memref<2x32x128xf32, #tpu.memory_space<vmem>>) attributes {dimension_semantics = [], scalar_prefetch = 0 : i64, scratch_operands = 2 : i64, tpu.core_type = #tpu.core_type<tc>} {
    %cst = arith.constant 0.000000e+00 : f32
    %0 = vector.broadcast %cst : f32 to vector<2x32x128xf32>
    %c0 = arith.constant 0 : index
    %c0_0 = arith.constant 0 : index
    %c0_1 = arith.constant 0 : index
    %1 = vector.load %arg6[%c0, %c0_0, %c0_1] : memref<2x32x128xf32, #tpu.memory_space<vmem>>, vector<2x32x128xf32>
    tpu.vector_store %arg6[%c0, %c0_0, %c0_1], %0 {strides = array<i32>} : memref<2x32x128xf32, #tpu.memory_space<vmem>>, vector<2x32x128xf32>,
    %cst_2 = arith.constant 0x7F800000 : f32
    %2 = vector.broadcast %cst_2 : f32 to vector<2x32x128xf32>
    %c0_3 = arith.constant 0 : index
    %c0_4 = arith.constant 0 : index
    %c0_5 = arith.constant 0 : index
    %3 = vector.load %arg7[%c0_3, %c0_4, %c0_5] : memref<2x32x128xf32, #tpu.memory_space<vmem>>, vector<2x32x128xf32>
    tpu.vector_store %arg7[%c0_3, %c0_4, %c0_5], %2 {strides = array<i32>} : memref<2x32x128xf32, #tpu.memory_space<vmem>>, vector<2x32x128xf32>,
    %c0_6 = arith.constant 0 : index
    %c0_7 = arith.constant 0 : index
    %c0_8 = arith.constant 0 : index
    %4 = vector.load %arg0[%c0_6, %c0_7, %c0_8] : memref<2x32x1024xf32, #tpu.memory_space<vmem>>, vector<2x32x128xf32>
    %c0_9 = arith.constant 0 : index
    %c0_10 = arith.constant 0 : index
    %c0_11 = arith.constant 0 : index
    %5 = vector.load %arg6[%c0_9, %c0_10, %c0_11] : memref<2x32x128xf32, #tpu.memory_space<vmem>>, vector<2x32x128xf32>
    %6 = arith.addf %5, %4 : vector<2x32x128xf32>
    %c0_12 = arith.constant 0 : index
    %c0_13 = arith.constant 0 : index
    %c0_14 = arith.constant 0 : index
    %7 = vector.load %arg6[%c0_12, %c0_13, %c0_14] : memref<2x32x128xf32, #tpu.memory_space<vmem>>, vector<2x32x128xf32>
    tpu.vector_store %arg6[%c0_12, %c0_13, %c0_14], %6 {strides = array<i32>} : memref<2x32x128xf32, #tpu.memory_space<vmem>>, vector<2x32x128xf32>,
    %c0_15 = arith.constant 0 : index
    %c0_16 = arith.constant 0 : index
    %c0_17 = arith.constant 0 : index
    %8 = vector.load %arg7[%c0_15, %c0_16, %c0_17] : memref<2x32x128xf32, #tpu.memory_space<vmem>>, vector<2x32x128xf32>
    %9 = arith.minimumf %8, %4 : vector<2x32x128xf32>
    %c0_18 = arith.constant 0 : index
    %c0_19 = arith.constant 0 : index
    %c0_20 = arith.constant 0 : index
    %10 = vector.load %arg7[%c0_18, %c0_19, %c0_20] : memref<2x32x128xf32, #tpu.memory_space<vmem>>, vector<2x32x128xf32>
    tpu.vector_store %arg7[%c0_18, %c0_19, %c0_20], %9 {strides = array<i32>} : memref<2x32x128xf32, #tpu.memory_space<vmem>>, vector<2x32x128xf32>,
    %c0_21 = arith.constant 0 : index
    %c0_22 = arith.constant 0 : index
    %c128 = arith.constant 128 : index
    %11 = vector.load %arg0[%c0_21, %c0_22, %c128] : memref<2x32x1024xf32, #tpu.memory_space<vmem>>, vector<2x32x128xf32>
    %c0_23 = arith.constant 0 : index
    %c0_24 = arith.constant 0 : index
    %c0_25 = arith.constant 0 : index
    %12 = vector.load %arg6[%c0_23, %c0_24, %c0_25] : memref<2x32x128xf32, #tpu.memory_space<vmem>>, vector<2x32x128xf32>
    %13 = arith.addf %12, %11 : vector<2x32x128xf32>
    %c0_26 = arith.constant 0 : index
    %c0_27 = arith.constant 0 : index
    %c0_28 = arith.constant 0 : index
    %14 = vector.load %arg6[%c0_26, %c0_27, %c0_28] : memref<2x32x128xf32, #tpu.memory_space<vmem>>, vector<2x32x128xf32>
    tpu.vector_store %arg6[%c0_26, %c0_27, %c0_28], %13 {strides = array<i32>} : memref<2x32x128xf32, #tpu.memory_space<vmem>>, vector<2x32x128xf32>,
    %c0_29 = arith.constant 0 : index
    %c0_30 = arith.constant 0 : index
    %c0_31 = arith.constant 0 : index
    %15 = vector.load %arg7[%c0_29, %c0_30, %c0_31] : memref<2x32x128xf32, #tpu.memory_space<vmem>>, vector<2x32x128xf32>
    %16 = arith.minimumf %15, %11 : vector<2x32x128xf32>
    %c0_32 = arith.constant 0 : index
    %c0_33 = arith.constant 0 : index
    %c0_34 = arith.constant 0 : index
    %17 = vector.load %arg7[%c0_32, %c0_33, %c0_34] : memref<2x32x128xf32, #tpu.memory_space<vmem>>, vector<2x32x128xf32>
    tpu.vector_store %arg7[%c0_32, %c0_33, %c0_34], %16 {strides = array<i32>} : memref<2x32x128xf32, #tpu.memory_space<vmem>>, vector<2x32x128xf32>,
    %c0_35 = arith.constant 0 : index
    %c0_36 = arith.constant 0 : index
    %c256 = arith.constant 256 : index
    %18 = vector.load %arg0[%c0_35, %c0_36, %c256] : memref<2x32x1024xf32, #tpu.memory_space<vmem>>, vector<2x32x128xf32>
    %c0_37 = arith.constant 0 : index
    %c0_38 = arith.constant 0 : index
    %c0_39 = arith.constant 0 : index
    %19 = vector.load %arg6[%c0_37, %c0_38, %c0_39] : memref<2x32x128xf32, #tpu.memory_space<vmem>>, vector<2x32x128xf32>
    %20 = arith.addf %19, %18 : vector<2x32x128xf32>
    %c0_40 = arith.constant 0 : index
    %c0_41 = arith.constant 0 : index
    %c0_42 = arith.constant 0 : index
    %21 = vector.load %arg6[%c0_40, %c0_41, %c0_42] : memref<2x32x128xf32, #tpu.memory_space<vmem>>, vector<2x32x128xf32>
    tpu.vector_store %arg6[%c0_40, %c0_41, %c0_42], %20 {strides = array<i32>} : memref<2x32x128xf32, #tpu.memory_space<vmem>>, vector<2x32x128xf32>,
    %c0_43 = arith.constant 0 : index
    %c0_44 = arith.constant 0 : index
    %c0_45 = arith.constant 0 : index
    %22 = vector.load %arg7[%c0_43, %c0_44, %c0_45] : memref<2x32x128xf32, #tpu.memory_space<vmem>>, vector<2x32x128xf32>
    %23 = arith.minimumf %22, %18 : vector<2x32x128xf32>
    %c0_46 = arith.constant 0 : index
    %c0_47 = arith.constant 0 : index
    %c0_48 = arith.constant 0 : index
    %24 = vector.load %arg7[%c0_46, %c0_47, %c0_48] : memref<2x32x128xf32, #tpu.memory_space<vmem>>, vector<2x32x128xf32>
    tpu.vector_store %arg7[%c0_46, %c0_47, %c0_48], %23 {strides = array<i32>} : memref<2x32x128xf32, #tpu.memory_space<vmem>>, vector<2x32x128xf32>,
    %c0_49 = arith.constant 0 : index
    %c0_50 = arith.constant 0 : index
    %c384 = arith.constant 384 : index
    %25 = vector.load %arg0[%c0_49, %c0_50, %c384] : memref<2x32x1024xf32, #tpu.memory_space<vmem>>, vector<2x32x128xf32>
    %c0_51 = arith.constant 0 : index
    %c0_52 = arith.constant 0 : index
    %c0_53 = arith.constant 0 : index
    %26 = vector.load %arg6[%c0_51, %c0_52, %c0_53] : memref<2x32x128xf32, #tpu.memory_space<vmem>>, vector<2x32x128xf32>
    %27 = arith.addf %26, %25 : vector<2x32x128xf32>
    %c0_54 = arith.constant 0 : index
    %c0_55 = arith.constant 0 : index
    %c0_56 = arith.constant 0 : index
    %28 = vector.load %arg6[%c0_54, %c0_55, %c0_56] : memref<2x32x128xf32, #tpu.memory_space<vmem>>, vector<2x32x128xf32>
    tpu.vector_store %arg6[%c0_54, %c0_55, %c0_56], %27 {strides = array<i32>} : memref<2x32x128xf32, #tpu.memory_space<vmem>>, vector<2x32x128xf32>,
    %c0_57 = arith.constant 0 : index
    %c0_58 = arith.constant 0 : index
    %c0_59 = arith.constant 0 : index
    %29 = vector.load %arg7[%c0_57, %c0_58, %c0_59] : memref<2x32x128xf32, #tpu.memory_space<vmem>>, vector<2x32x128xf32>
    %30 = arith.minimumf %29, %25 : vector<2x32x128xf32>
    %c0_60 = arith.constant 0 : index
    %c0_61 = arith.constant 0 : index
    %c0_62 = arith.constant 0 : index
    %31 = vector.load %arg7[%c0_60, %c0_61, %c0_62] : memref<2x32x128xf32, #tpu.memory_space<vmem>>, vector<2x32x128xf32>
    tpu.vector_store %arg7[%c0_60, %c0_61, %c0_62], %30 {strides = array<i32>} : memref<2x32x128xf32, #tpu.memory_space<vmem>>, vector<2x32x128xf32>,
    %c0_63 = arith.constant 0 : index
    %c0_64 = arith.constant 0 : index
    %c512 = arith.constant 512 : index
    %32 = vector.load %arg0[%c0_63, %c0_64, %c512] : memref<2x32x1024xf32, #tpu.memory_space<vmem>>, vector<2x32x128xf32>
    %c0_65 = arith.constant 0 : index
    %c0_66 = arith.constant 0 : index
    %c0_67 = arith.constant 0 : index
    %33 = vector.load %arg6[%c0_65, %c0_66, %c0_67] : memref<2x32x128xf32, #tpu.memory_space<vmem>>, vector<2x32x128xf32>
    %34 = arith.addf %33, %32 : vector<2x32x128xf32>
    %c0_68 = arith.constant 0 : index
    %c0_69 = arith.constant 0 : index
    %c0_70 = arith.constant 0 : index
    %35 = vector.load %arg6[%c0_68, %c0_69, %c0_70] : memref<2x32x128xf32, #tpu.memory_space<vmem>>, vector<2x32x128xf32>
    tpu.vector_store %arg6[%c0_68, %c0_69, %c0_70], %34 {strides = array<i32>} : memref<2x32x128xf32, #tpu.memory_space<vmem>>, vector<2x32x128xf32>,
    %c0_71 = arith.constant 0 : index
    %c0_72 = arith.constant 0 : index
    %c0_73 = arith.constant 0 : index
    %36 = vector.load %arg7[%c0_71, %c0_72, %c0_73] : memref<2x32x128xf32, #tpu.memory_space<vmem>>, vector<2x32x128xf32>
    %37 = arith.minimumf %36, %32 : vector<2x32x128xf32>
    %c0_74 = arith.constant 0 : index
    %c0_75 = arith.constant 0 : index
    %c0_76 = arith.constant 0 : index
    %38 = vector.load %arg7[%c0_74, %c0_75, %c0_76] : memref<2x32x128xf32, #tpu.memory_space<vmem>>, vector<2x32x128xf32>
    tpu.vector_store %arg7[%c0_74, %c0_75, %c0_76], %37 {strides = array<i32>} : memref<2x32x128xf32, #tpu.memory_space<vmem>>, vector<2x32x128xf32>,
    %c0_77 = arith.constant 0 : index
    %c0_78 = arith.constant 0 : index
    %c640 = arith.constant 640 : index
    %39 = vector.load %arg0[%c0_77, %c0_78, %c640] : memref<2x32x1024xf32, #tpu.memory_space<vmem>>, vector<2x32x128xf32>
    %c0_79 = arith.constant 0 : index
    %c0_80 = arith.constant 0 : index
    %c0_81 = arith.constant 0 : index
    %40 = vector.load %arg6[%c0_79, %c0_80, %c0_81] : memref<2x32x128xf32, #tpu.memory_space<vmem>>, vector<2x32x128xf32>
    %41 = arith.addf %40, %39 : vector<2x32x128xf32>
    %c0_82 = arith.constant 0 : index
    %c0_83 = arith.constant 0 : index
    %c0_84 = arith.constant 0 : index
    %42 = vector.load %arg6[%c0_82, %c0_83, %c0_84] : memref<2x32x128xf32, #tpu.memory_space<vmem>>, vector<2x32x128xf32>
    tpu.vector_store %arg6[%c0_82, %c0_83, %c0_84], %41 {strides = array<i32>} : memref<2x32x128xf32, #tpu.memory_space<vmem>>, vector<2x32x128xf32>,
    %c0_85 = arith.constant 0 : index
    %c0_86 = arith.constant 0 : index
    %c0_87 = arith.constant 0 : index
    %43 = vector.load %arg7[%c0_85, %c0_86, %c0_87] : memref<2x32x128xf32, #tpu.memory_space<vmem>>, vector<2x32x128xf32>
    %44 = arith.minimumf %43, %39 : vector<2x32x128xf32>
    %c0_88 = arith.constant 0 : index
    %c0_89 = arith.constant 0 : index
    %c0_90 = arith.constant 0 : index
    %45 = vector.load %arg7[%c0_88, %c0_89, %c0_90] : memref<2x32x128xf32, #tpu.memory_space<vmem>>, vector<2x32x128xf32>
    tpu.vector_store %arg7[%c0_88, %c0_89, %c0_90], %44 {strides = array<i32>} : memref<2x32x128xf32, #tpu.memory_space<vmem>>, vector<2x32x128xf32>,
    %c0_91 = arith.constant 0 : index
    %c0_92 = arith.constant 0 : index
    %c768 = arith.constant 768 : index
    %46 = vector.load %arg0[%c0_91, %c0_92, %c768] : memref<2x32x1024xf32, #tpu.memory_space<vmem>>, vector<2x32x128xf32>
    %c0_93 = arith.constant 0 : index
    %c0_94 = arith.constant 0 : index
    %c0_95 = arith.constant 0 : index
    %47 = vector.load %arg6[%c0_93, %c0_94, %c0_95] : memref<2x32x128xf32, #tpu.memory_space<vmem>>, vector<2x32x128xf32>
    %48 = arith.addf %47, %46 : vector<2x32x128xf32>
    %c0_96 = arith.constant 0 : index
    %c0_97 = arith.constant 0 : index
    %c0_98 = arith.constant 0 : index
    %49 = vector.load %arg6[%c0_96, %c0_97, %c0_98] : memref<2x32x128xf32, #tpu.memory_space<vmem>>, vector<2x32x128xf32>
    tpu.vector_store %arg6[%c0_96, %c0_97, %c0_98], %48 {strides = array<i32>} : memref<2x32x128xf32, #tpu.memory_space<vmem>>, vector<2x32x128xf32>,
    %c0_99 = arith.constant 0 : index
    %c0_100 = arith.constant 0 : index
    %c0_101 = arith.constant 0 : index
    %50 = vector.load %arg7[%c0_99, %c0_100, %c0_101] : memref<2x32x128xf32, #tpu.memory_space<vmem>>, vector<2x32x128xf32>
    %51 = arith.minimumf %50, %46 : vector<2x32x128xf32>
    %c0_102 = arith.constant 0 : index
    %c0_103 = arith.constant 0 : index
    %c0_104 = arith.constant 0 : index
    %52 = vector.load %arg7[%c0_102, %c0_103, %c0_104] : memref<2x32x128xf32, #tpu.memory_space<vmem>>, vector<2x32x128xf32>
    tpu.vector_store %arg7[%c0_102, %c0_103, %c0_104], %51 {strides = array<i32>} : memref<2x32x128xf32, #tpu.memory_space<vmem>>, vector<2x32x128xf32>,
    %c0_105 = arith.constant 0 : index
    %c0_106 = arith.constant 0 : index
    %c896 = arith.constant 896 : index
    %53 = vector.load %arg0[%c0_105, %c0_106, %c896] : memref<2x32x1024xf32, #tpu.memory_space<vmem>>, vector<2x32x128xf32>
    %c0_107 = arith.constant 0 : index
    %c0_108 = arith.constant 0 : index
    %c0_109 = arith.constant 0 : index
    %54 = vector.load %arg6[%c0_107, %c0_108, %c0_109] : memref<2x32x128xf32, #tpu.memory_space<vmem>>, vector<2x32x128xf32>
    %55 = arith.addf %54, %53 : vector<2x32x128xf32>
    %c0_110 = arith.constant 0 : index
    %c0_111 = arith.constant 0 : index
    %c0_112 = arith.constant 0 : index
    %56 = vector.load %arg6[%c0_110, %c0_111, %c0_112] : memref<2x32x128xf32, #tpu.memory_space<vmem>>, vector<2x32x128xf32>
    tpu.vector_store %arg6[%c0_110, %c0_111, %c0_112], %55 {strides = array<i32>} : memref<2x32x128xf32, #tpu.memory_space<vmem>>, vector<2x32x128xf32>,
    %c0_113 = arith.constant 0 : index
    %c0_114 = arith.constant 0 : index
    %c0_115 = arith.constant 0 : index
    %57 = vector.load %arg7[%c0_113, %c0_114, %c0_115] : memref<2x32x128xf32, #tpu.memory_space<vmem>>, vector<2x32x128xf32>
    %58 = arith.minimumf %57, %53 : vector<2x32x128xf32>
    %c0_116 = arith.constant 0 : index
    %c0_117 = arith.constant 0 : index
    %c0_118 = arith.constant 0 : index
    %59 = vector.load %arg7[%c0_116, %c0_117, %c0_118] : memref<2x32x128xf32, #tpu.memory_space<vmem>>, vector<2x32x128xf32>
    tpu.vector_store %arg7[%c0_116, %c0_117, %c0_118], %58 {strides = array<i32>} : memref<2x32x128xf32, #tpu.memory_space<vmem>>, vector<2x32x128xf32>,
    %c0_119 = arith.constant 0 : index
    %c0_120 = arith.constant 0 : index
    %c0_121 = arith.constant 0 : index
    %60 = vector.load %arg6[%c0_119, %c0_120, %c0_121] : memref<2x32x128xf32, #tpu.memory_space<vmem>>, vector<2x32x128xf32>
    %cst_122 = arith.constant dense<0.000000e+00> : vector<2x32xf32>
    %61 = vector.multi_reduction <add>, %60, %cst_122 [2] : vector<2x32x128xf32> to vector<2x32xf32>
    %cst_123 = arith.constant 9.765625E-4 : f32
    %62 = vector.broadcast %cst_123 : f32 to vector<2x32xf32>
    %63 = arith.mulf %61, %62 : vector<2x32xf32>
    %c0_124 = arith.constant 0 : index
    %c0_125 = arith.constant 0 : index
    %c0_126 = arith.constant 0 : index
    %64 = vector.load %arg7[%c0_124, %c0_125, %c0_126] : memref<2x32x128xf32, #tpu.memory_space<vmem>>, vector<2x32x128xf32>
    %cst_127 = arith.constant dense<0x7F800000> : vector<2x32xf32>
    %65 = vector.multi_reduction <minimumf>, %64, %cst_127 [2] : vector<2x32x128xf32> to vector<2x32xf32>
    %66 = tpu.concatenate %63, %65 in 0 : vector<2x32xf32>, vector<2x32xf32> -> vector<4x32xf32>
    %c0_128 = arith.constant 0 : index
    %c0_129 = arith.constant 0 : index
    %67 = vector.load %arg1[%c0_128, %c0_129] : memref<32x2xf32, #tpu.memory_space<vmem>>, vector<32x2xf32>
    %cst_130 = arith.constant dense<0.000000e+00> : vector<4x2xf32>
    %68 = tpu.matmul %66, %67, %cst_130 {dimension_numbers = #tpu.dot_dimension_numbers<[1], [0], [0], [1], [0, 0, 1, 1], [], []>} : vector<4x32xf32>, vector<32x2xf32>, vector<4x2xf32> -> vector<4x2xf32>
    %c0_131 = arith.constant 0 : index
    %c0_132 = arith.constant 0 : index
    %69 = vector.load %arg2[%c0_131, %c0_132] : memref<1x2xf32, #tpu.memory_space<vmem>>, vector<1x2xf32>
    %70 = vector.broadcast %69 : vector<1x2xf32> to vector<4x2xf32>
    %71 = arith.addf %68, %70 : vector<4x2xf32>
    %cst_133 = arith.constant 0.000000e+00 : f32
    %72 = vector.broadcast %cst_133 : f32 to vector<4x2xf32>
    %73 = arith.maximumf %71, %72 : vector<4x2xf32>
    %c0_134 = arith.constant 0 : index
    %c0_135 = arith.constant 0 : index
    %74 = vector.load %arg3[%c0_134, %c0_135] : memref<2x32xf32, #tpu.memory_space<vmem>>, vector<2x32xf32>
    %cst_136 = arith.constant dense<0.000000e+00> : vector<4x32xf32>
    %75 = tpu.matmul %73, %74, %cst_136 {dimension_numbers = #tpu.dot_dimension_numbers<[1], [0], [0], [1], [0, 0, 1, 1], [], []>} : vector<4x2xf32>, vector<2x32xf32>, vector<4x32xf32> -> vector<4x32xf32>
    %c0_137 = arith.constant 0 : index
    %c0_138 = arith.constant 0 : index
    %76 = vector.load %arg4[%c0_137, %c0_138] : memref<1x32xf32, #tpu.memory_space<vmem>>, vector<1x32xf32>
    %77 = vector.broadcast %76 : vector<1x32xf32> to vector<4x32xf32>
    %78 = arith.addf %75, %77 : vector<4x32xf32>
    %79 = vector.extract_strided_slice %78 {offsets = [0, 0], sizes = [2, 32], strides = [1, 1]} : vector<4x32xf32> to vector<2x32xf32>
    %80 = vector.extract_strided_slice %78 {offsets = [2, 0], sizes = [2, 32], strides = [1, 1]} : vector<4x32xf32> to vector<2x32xf32>
    %81 = arith.addf %79, %80 : vector<2x32xf32>
    %82 = arith.negf %81 : vector<2x32xf32>
    %83 = math.exp %82 : vector<2x32xf32>
    %cst_139 = arith.constant 1.000000e+00 : f32
    %84 = vector.broadcast %cst_139 : f32 to vector<2x32xf32>
    %85 = arith.addf %84, %83 : vector<2x32xf32>
    %86 = arith.divf %84, %85 : vector<2x32xf32>
    %87 = vector.shape_cast %86 : vector<2x32xf32> to vector<2x32x1xf32>
    %88 = vector.shape_cast %87 : vector<2x32x1xf32> to vector<2x32x1xf32>
    %89 = vector.broadcast %88 : vector<2x32x1xf32> to vector<2x32x128xf32>
    %c0_140 = arith.constant 0 : index
    %c0_141 = arith.constant 0 : index
    %c0_142 = arith.constant 0 : index
    %90 = vector.load %arg0[%c0_140, %c0_141, %c0_142] : memref<2x32x1024xf32, #tpu.memory_space<vmem>>, vector<2x32x128xf32>
    %91 = arith.mulf %90, %89 : vector<2x32x128xf32>
    %c0_143 = arith.constant 0 : index
    %c0_144 = arith.constant 0 : index
    %c0_145 = arith.constant 0 : index
    %92 = vector.load %arg5[%c0_143, %c0_144, %c0_145] : memref<2x32x1024xf32, #tpu.memory_space<vmem>>, vector<2x32x128xf32>
    tpu.vector_store %arg5[%c0_143, %c0_144, %c0_145], %91 {strides = array<i32>} : memref<2x32x1024xf32, #tpu.memory_space<vmem>>, vector<2x32x128xf32>,
    %c0_146 = arith.constant 0 : index
    %c0_147 = arith.constant 0 : index
    %c128_148 = arith.constant 128 : index
    %93 = vector.load %arg0[%c0_146, %c0_147, %c128_148] : memref<2x32x1024xf32, #tpu.memory_space<vmem>>, vector<2x32x128xf32>
    %94 = arith.mulf %93, %89 : vector<2x32x128xf32>
    %c0_149 = arith.constant 0 : index
    %c0_150 = arith.constant 0 : index
    %c128_151 = arith.constant 128 : index
    %95 = vector.load %arg5[%c0_149, %c0_150, %c128_151] : memref<2x32x1024xf32, #tpu.memory_space<vmem>>, vector<2x32x128xf32>
    tpu.vector_store %arg5[%c0_149, %c0_150, %c128_151], %94 {strides = array<i32>} : memref<2x32x1024xf32, #tpu.memory_space<vmem>>, vector<2x32x128xf32>,
    %c0_152 = arith.constant 0 : index
    %c0_153 = arith.constant 0 : index
    %c256_154 = arith.constant 256 : index
    %96 = vector.load %arg0[%c0_152, %c0_153, %c256_154] : memref<2x32x1024xf32, #tpu.memory_space<vmem>>, vector<2x32x128xf32>
    %97 = arith.mulf %96, %89 : vector<2x32x128xf32>
    %c0_155 = arith.constant 0 : index
    %c0_156 = arith.constant 0 : index
    %c256_157 = arith.constant 256 : index
    %98 = vector.load %arg5[%c0_155, %c0_156, %c256_157] : memref<2x32x1024xf32, #tpu.memory_space<vmem>>, vector<2x32x128xf32>
    tpu.vector_store %arg5[%c0_155, %c0_156, %c256_157], %97 {strides = array<i32>} : memref<2x32x1024xf32, #tpu.memory_space<vmem>>, vector<2x32x128xf32>,
    %c0_158 = arith.constant 0 : index
    %c0_159 = arith.constant 0 : index
    %c384_160 = arith.constant 384 : index
    %99 = vector.load %arg0[%c0_158, %c0_159, %c384_160] : memref<2x32x1024xf32, #tpu.memory_space<vmem>>, vector<2x32x128xf32>
    %100 = arith.mulf %99, %89 : vector<2x32x128xf32>
    %c0_161 = arith.constant 0 : index
    %c0_162 = arith.constant 0 : index
    %c384_163 = arith.constant 384 : index
    %101 = vector.load %arg5[%c0_161, %c0_162, %c384_163] : memref<2x32x1024xf32, #tpu.memory_space<vmem>>, vector<2x32x128xf32>
    tpu.vector_store %arg5[%c0_161, %c0_162, %c384_163], %100 {strides = array<i32>} : memref<2x32x1024xf32, #tpu.memory_space<vmem>>, vector<2x32x128xf32>,
    %c0_164 = arith.constant 0 : index
    %c0_165 = arith.constant 0 : index
    %c512_166 = arith.constant 512 : index
    %102 = vector.load %arg0[%c0_164, %c0_165, %c512_166] : memref<2x32x1024xf32, #tpu.memory_space<vmem>>, vector<2x32x128xf32>
    %103 = arith.mulf %102, %89 : vector<2x32x128xf32>
    %c0_167 = arith.constant 0 : index
    %c0_168 = arith.constant 0 : index
    %c512_169 = arith.constant 512 : index
    %104 = vector.load %arg5[%c0_167, %c0_168, %c512_169] : memref<2x32x1024xf32, #tpu.memory_space<vmem>>, vector<2x32x128xf32>
    tpu.vector_store %arg5[%c0_167, %c0_168, %c512_169], %103 {strides = array<i32>} : memref<2x32x1024xf32, #tpu.memory_space<vmem>>, vector<2x32x128xf32>,
    %c0_170 = arith.constant 0 : index
    %c0_171 = arith.constant 0 : index
    %c640_172 = arith.constant 640 : index
    %105 = vector.load %arg0[%c0_170, %c0_171, %c640_172] : memref<2x32x1024xf32, #tpu.memory_space<vmem>>, vector<2x32x128xf32>
    %106 = arith.mulf %105, %89 : vector<2x32x128xf32>
    %c0_173 = arith.constant 0 : index
    %c0_174 = arith.constant 0 : index
    %c640_175 = arith.constant 640 : index
    %107 = vector.load %arg5[%c0_173, %c0_174, %c640_175] : memref<2x32x1024xf32, #tpu.memory_space<vmem>>, vector<2x32x128xf32>
    tpu.vector_store %arg5[%c0_173, %c0_174, %c640_175], %106 {strides = array<i32>} : memref<2x32x1024xf32, #tpu.memory_space<vmem>>, vector<2x32x128xf32>,
    %c0_176 = arith.constant 0 : index
    %c0_177 = arith.constant 0 : index
    %c768_178 = arith.constant 768 : index
    %108 = vector.load %arg0[%c0_176, %c0_177, %c768_178] : memref<2x32x1024xf32, #tpu.memory_space<vmem>>, vector<2x32x128xf32>
    %109 = arith.mulf %108, %89 : vector<2x32x128xf32>
    %c0_179 = arith.constant 0 : index
    %c0_180 = arith.constant 0 : index
    %c768_181 = arith.constant 768 : index
    %110 = vector.load %arg5[%c0_179, %c0_180, %c768_181] : memref<2x32x1024xf32, #tpu.memory_space<vmem>>, vector<2x32x128xf32>
    tpu.vector_store %arg5[%c0_179, %c0_180, %c768_181], %109 {strides = array<i32>} : memref<2x32x1024xf32, #tpu.memory_space<vmem>>, vector<2x32x128xf32>,
    %c0_182 = arith.constant 0 : index
    %c0_183 = arith.constant 0 : index
    %c896_184 = arith.constant 896 : index
    %111 = vector.load %arg0[%c0_182, %c0_183, %c896_184] : memref<2x32x1024xf32, #tpu.memory_space<vmem>>, vector<2x32x128xf32>
    %112 = arith.mulf %111, %89 : vector<2x32x128xf32>
    %c0_185 = arith.constant 0 : index
    %c0_186 = arith.constant 0 : index
    %c896_187 = arith.constant 896 : index
    %113 = vector.load %arg5[%c0_185, %c0_186, %c896_187] : memref<2x32x1024xf32, #tpu.memory_space<vmem>>, vector<2x32x128xf32>
    tpu.vector_store %arg5[%c0_185, %c0_186, %c896_187], %112 {strides = array<i32>} : memref<2x32x1024xf32, #tpu.memory_space<vmem>>, vector<2x32x128xf32>,
    return
  }
}

</mosaic_0001>

<llo_original>
// kernel: tpu_custom_call.1
$region0: #{tpu_custom_call.1}
  #allocation0 [shape = 'u32[]', space=smem, size = 0x4, offset = 0x4, fixed_abs, tag = 'smem constant byte address 0x4 - core index']
  #allocation1 [shape = 'u32[144,128]{1,0:T(1,128)}', space=vmem, size = 0x12000, scoped, tag = 'internal scratch']
  #allocation2 [shape = 'f32[2,32,128]{2,1,0:T(8,128)}', space=vmem, size = 0x8000, scoped, tag = 'scratch operand']
  #allocation3 [shape = 'f32[2,32,128]{2,1,0:T(8,128)}', space=vmem, size = 0x8000, scoped, tag = 'scratch operand']
  %s0 = inlined_call_operand.hbm [shape: f32[2,32,1024], index: 0, kind: input, shape index: {}]
  %s1 = inlined_call_operand.vmem [shape: f32[32,2], index: 1, kind: input, shape index: {}]
  %s2 = inlined_call_operand.vmem [shape: f32[1,2], index: 2, kind: input, shape index: {}]
  %s3 = inlined_call_operand.vmem [shape: f32[2,32], index: 3, kind: input, shape index: {}]
  %s4 = inlined_call_operand.vmem [shape: f32[1,32], index: 4, kind: input, shape index: {}]
  %s5 = inlined_call_operand.hbm [shape: f32[2,32,1024], index: 5, kind: output, shape index: {}]
  %s6 = sld [smem:[#allocation0]]
  $region34: #{tpu_custom_call.1} parent=0
    _
  %s8 = ssub.s32 1, %s6
  %s9 = scalar_select 0, %s8, %s6
  $region1: #{tpu_custom_call.1} parent=0
    #allocation4 [shape = 'u8[262144]{0}', space=vmem, size = 0x40000, scoped, tag = 'input window, operand 0, single buffered']
    #allocation5 [shape = 's32[1]{0}', space=sflag, size = 0x4, scoped, tag = 'scoped memory for tpu_custom_call.1']
    #allocation6 [shape = 's32[1]{0}', space=sflag, size = 0x4, scoped, tag = 'scoped memory for tpu_custom_call.1']
    #allocation7 [shape = 'u8[262144]{0}', space=vmem, size = 0x40000, scoped, tag = 'output window, operand 0, single buffered']
    %10 = vsyncpa [#allocation5], 0
    %11 = vsyncpa [#allocation6], 0
    // Predicated region
    $region2: #{tpu_custom_call.1} parent=1 // pred_check
      _
    $region3: #{tpu_custom_call.1} parent=1 // pred_check_branch
      %13 = sbr.rel (0) target = $region5
    $region4: #{tpu_custom_call.1} parent=1 // pred_region
      %s15 = ssub.s32 8192, 8192
      %16 = vsyncadd [#allocation5], %s15
      %s17 = sshll.u32 [#allocation4], 4
      %s18 = int_to_ptr.vmem [resolvable:$true] %s17
      %23 = dma.hbm_to_vmem [thread:$0]  %s0, 8192, %s18, [#allocation5], 1024, 1024, 64
    $region5: #{tpu_custom_call.1} parent=1 // pred_fallthru
      _
    // Predicated region
    $region6: #{tpu_custom_call.1} parent=1 // pred_check
      _
    $region7: #{tpu_custom_call.1} parent=1 // pred_check_branch
      %25 = sbr.rel (0) target = $region9
    $region8: #{tpu_custom_call.1} parent=1 // pred_region
      _
    $region9: #{tpu_custom_call.1} parent=1 // pred_fallthru
      _
    // Predicated region
    $region10: #{tpu_custom_call.1} parent=1 // pred_check
      _
    $region11: #{tpu_custom_call.1} parent=1 // pred_check_branch
      %27 = sbr.rel (0) target = $region13
    $region12: #{tpu_custom_call.1} parent=1 // pred_region
      _
    $region13: #{tpu_custom_call.1} parent=1 // pred_fallthru
      _
    // Predicated region
    $region14: #{tpu_custom_call.1} parent=1 // pred_check
      _
    $region15: #{tpu_custom_call.1} parent=1 // pred_check_branch
      %29 = sbr.rel (0) target = $region17
    $region16: #{tpu_custom_call.1} parent=1 // pred_region
      _
    $region17: #{tpu_custom_call.1} parent=1 // pred_fallthru
      _
    // Predicated region
    $region18: #{tpu_custom_call.1} parent=1 // pred_check
      _
    $region19: #{tpu_custom_call.1} parent=1 // pred_check_branch
      %31 = sbr.rel (0) target = $region21
    $region20: #{tpu_custom_call.1} parent=1 // pred_region
      _
    $region21: #{tpu_custom_call.1} parent=1 // pred_fallthru
      _
    // Predicated region
    $region22: #{tpu_custom_call.1} parent=1 // pred_check
      _
    $region23: #{tpu_custom_call.1} parent=1 // pred_check_branch
      %33 = sbr.rel (0) target = $region25
    $region24: #{tpu_custom_call.1} parent=1 // pred_region
      %34 = dma.done [#allocation5], 8192
    $region25: #{tpu_custom_call.1} parent=1 // pred_fallthru
      _
    %35 = vst [vmem:[#allocation2] sm:$0xff] 0.0
    %36 = vst [vmem:[#allocation2 + $0x8] sm:$0xff] 0.0
    %37 = vst [vmem:[#allocation2 + $0x10] sm:$0xff] 0.0
    %38 = vst [vmem:[#allocation2 + $0x18] sm:$0xff] 0.0
    %39 = vst [vmem:[#allocation2 + $0x20] sm:$0xff] 0.0
    %40 = vst [vmem:[#allocation2 + $0x28] sm:$0xff] 0.0
    %41 = vst [vmem:[#allocation2 + $0x30] sm:$0xff] 0.0
    %42 = vst [vmem:[#allocation2 + $0x38] sm:$0xff] 0.0
    %43 = vst [vmem:[#allocation3] sm:$0xff] inf
    %44 = vst [vmem:[#allocation3 + $0x8] sm:$0xff] inf
    %45 = vst [vmem:[#allocation3 + $0x10] sm:$0xff] inf
    %46 = vst [vmem:[#allocation3 + $0x18] sm:$0xff] inf
    %47 = vst [vmem:[#allocation3 + $0x20] sm:$0xff] inf
    %48 = vst [vmem:[#allocation3 + $0x28] sm:$0xff] inf
    %49 = vst [vmem:[#allocation3 + $0x30] sm:$0xff] inf
    %50 = vst [vmem:[#allocation3 + $0x38] sm:$0xff] inf
    %v51 = vld [vmem:[#allocation4] sm:$0xff]
    %v52 = vld [vmem:[#allocation4 + $0x40] sm:$0xff]
    %v53 = vld [vmem:[#allocation4 + $0x80] sm:$0xff]
    %v54 = vld [vmem:[#allocation4 + $0xc0] sm:$0xff]
    %v55 = vld [vmem:[#allocation4 + $0x100] sm:$0xff]
    %v56 = vld [vmem:[#allocation4 + $0x140] sm:$0xff]
    %v57 = vld [vmem:[#allocation4 + $0x180] sm:$0xff]
    %v58 = vld [vmem:[#allocation4 + $0x1c0] sm:$0xff]
    %v59 = vld [vmem:[#allocation2] sm:$0xff]
    %v60 = vld [vmem:[#allocation2 + $0x8] sm:$0xff]
    %v61 = vld [vmem:[#allocation2 + $0x10] sm:$0xff]
    %v62 = vld [vmem:[#allocation2 + $0x18] sm:$0xff]
    %v63 = vld [vmem:[#allocation2 + $0x20] sm:$0xff]
    %v64 = vld [vmem:[#allocation2 + $0x28] sm:$0xff]
    %v65 = vld [vmem:[#allocation2 + $0x30] sm:$0xff]
    %v66 = vld [vmem:[#allocation2 + $0x38] sm:$0xff]
    %v67 = vadd.f32 %v59, %v51
    %v68 = vadd.f32 %v60, %v52
    %v69 = vadd.f32 %v61, %v53
    %v70 = vadd.f32 %v62, %v54
    %v71 = vadd.f32 %v63, %v55
    %v72 = vadd.f32 %v64, %v56
    %v73 = vadd.f32 %v65, %v57
    %v74 = vadd.f32 %v66, %v58
    %75 = vst [vmem:[#allocation2] sm:$0xff] %v67
    %76 = vst [vmem:[#allocation2 + $0x8] sm:$0xff] %v68
    %77 = vst [vmem:[#allocation2 + $0x10] sm:$0xff] %v69
    %78 = vst [vmem:[#allocation2 + $0x18] sm:$0xff] %v70
    %79 = vst [vmem:[#allocation2 + $0x20] sm:$0xff] %v71
    %80 = vst [vmem:[#allocation2 + $0x28] sm:$0xff] %v72
    %81 = vst [vmem:[#allocation2 + $0x30] sm:$0xff] %v73
    %82 = vst [vmem:[#allocation2 + $0x38] sm:$0xff] %v74
    %v83 = vld [vmem:[#allocation3] sm:$0xff]
    %v84 = vld [vmem:[#allocation3 + $0x8] sm:$0xff]
    %v85 = vld [vmem:[#allocation3 + $0x10] sm:$0xff]
    %v86 = vld [vmem:[#allocation3 + $0x18] sm:$0xff]
    %v87 = vld [vmem:[#allocation3 + $0x20] sm:$0xff]
    %v88 = vld [vmem:[#allocation3 + $0x28] sm:$0xff]
    %v89 = vld [vmem:[#allocation3 + $0x30] sm:$0xff]
    %v90 = vld [vmem:[#allocation3 + $0x38] sm:$0xff]
    %v91 = vmin.f32 %v83, %v51
    %v92 = vmin.f32 %v84, %v52
    %v93 = vmin.f32 %v85, %v53
    %v94 = vmin.f32 %v86, %v54
    %v95 = vmin.f32 %v87, %v55
    %v96 = vmin.f32 %v88, %v56
    %v97 = vmin.f32 %v89, %v57
    %v98 = vmin.f32 %v90, %v58
    %99 = vst [vmem:[#allocation3] sm:$0xff] %v91
    %100 = vst [vmem:[#allocation3 + $0x8] sm:$0xff] %v92
    %101 = vst [vmem:[#allocation3 + $0x10] sm:$0xff] %v93
    %102 = vst [vmem:[#allocation3 + $0x18] sm:$0xff] %v94
    %103 = vst [vmem:[#allocation3 + $0x20] sm:$0xff] %v95
    %104 = vst [vmem:[#allocation3 + $0x28] sm:$0xff] %v96
    %105 = vst [vmem:[#allocation3 + $0x30] sm:$0xff] %v97
    %106 = vst [vmem:[#allocation3 + $0x38] sm:$0xff] %v98
    %v107 = vld [vmem:[#allocation4 + $0x8] sm:$0xff]
    %v108 = vld [vmem:[#allocation4 + $0x48] sm:$0xff]
    %v109 = vld [vmem:[#allocation4 + $0x88] sm:$0xff]
    %v110 = vld [vmem:[#allocation4 + $0xc8] sm:$0xff]
    %v111 = vld [vmem:[#allocation4 + $0x108] sm:$0xff]
    %v112 = vld [vmem:[#allocation4 + $0x148] sm:$0xff]
    %v113 = vld [vmem:[#allocation4 + $0x188] sm:$0xff]
    %v114 = vld [vmem:[#allocation4 + $0x1c8] sm:$0xff]
    %v115 = vld [vmem:[#allocation2] sm:$0xff]
    %v116 = vld [vmem:[#allocation2 + $0x8] sm:$0xff]
    %v117 = vld [vmem:[#allocation2 + $0x10] sm:$0xff]
    %v118 = vld [vmem:[#allocation2 + $0x18] sm:$0xff]
    %v119 = vld [vmem:[#allocation2 + $0x20] sm:$0xff]
    %v120 = vld [vmem:[#allocation2 + $0x28] sm:$0xff]
    %v121 = vld [vmem:[#allocation2 + $0x30] sm:$0xff]
    %v122 = vld [vmem:[#allocation2 + $0x38] sm:$0xff]
    %v123 = vadd.f32 %v115, %v107
    %v124 = vadd.f32 %v116, %v108
    %v125 = vadd.f32 %v117, %v109
    %v126 = vadd.f32 %v118, %v110
    %v127 = vadd.f32 %v119, %v111
    %v128 = vadd.f32 %v120, %v112
    %v129 = vadd.f32 %v121, %v113
    %v130 = vadd.f32 %v122, %v114
    %131 = vst [vmem:[#allocation2] sm:$0xff] %v123
    %132 = vst [vmem:[#allocation2 + $0x8] sm:$0xff] %v124
    %133 = vst [vmem:[#allocation2 + $0x10] sm:$0xff] %v125
    %134 = vst [vmem:[#allocation2 + $0x18] sm:$0xff] %v126
    %135 = vst [vmem:[#allocation2 + $0x20] sm:$0xff] %v127
    %136 = vst [vmem:[#allocation2 + $0x28] sm:$0xff] %v128
    %137 = vst [vmem:[#allocation2 + $0x30] sm:$0xff] %v129
    %138 = vst [vmem:[#allocation2 + $0x38] sm:$0xff] %v130
    %v139 = vld [vmem:[#allocation3] sm:$0xff]
    %v140 = vld [vmem:[#allocation3 + $0x8] sm:$0xff]
    %v141 = vld [vmem:[#allocation3 + $0x10] sm:$0xff]
    %v142 = vld [vmem:[#allocation3 + $0x18] sm:$0xff]
    %v143 = vld [vmem:[#allocation3 + $0x20] sm:$0xff]
    %v144 = vld [vmem:[#allocation3 + $0x28] sm:$0xff]
    %v145 = vld [vmem:[#allocation3 + $0x30] sm:$0xff]
    %v146 = vld [vmem:[#allocation3 + $0x38] sm:$0xff]
    %v147 = vmin.f32 %v139, %v107
    %v148 = vmin.f32 %v140, %v108
    %v149 = vmin.f32 %v141, %v109
    %v150 = vmin.f32 %v142, %v110
    %v151 = vmin.f32 %v143, %v111
    %v152 = vmin.f32 %v144, %v112
    %v153 = vmin.f32 %v145, %v113
    %v154 = vmin.f32 %v146, %v114
    %155 = vst [vmem:[#allocation3] sm:$0xff] %v147
    %156 = vst [vmem:[#allocation3 + $0x8] sm:$0xff] %v148
    %157 = vst [vmem:[#allocation3 + $0x10] sm:$0xff] %v149
    %158 = vst [vmem:[#allocation3 + $0x18] sm:$0xff] %v150
    %159 = vst [vmem:[#allocation3 + $0x20] sm:$0xff] %v151
    %160 = vst [vmem:[#allocation3 + $0x28] sm:$0xff] %v152
    %161 = vst [vmem:[#allocation3 + $0x30] sm:$0xff] %v153
    %162 = vst [vmem:[#allocation3 + $0x38] sm:$0xff] %v154
    %v163 = vld [vmem:[#allocation4 + $0x10] sm:$0xff]
    %v164 = vld [vmem:[#allocation4 + $0x50] sm:$0xff]
    %v165 = vld [vmem:[#allocation4 + $0x90] sm:$0xff]
    %v166 = vld [vmem:[#allocation4 + $0xd0] sm:$0xff]
    %v167 = vld [vmem:[#allocation4 + $0x110] sm:$0xff]
    %v168 = vld [vmem:[#allocation4 + $0x150] sm:$0xff]
    %v169 = vld [vmem:[#allocation4 + $0x190] sm:$0xff]
    %v170 = vld [vmem:[#allocation4 + $0x1d0] sm:$0xff]
    %v171 = vld [vmem:[#allocation2] sm:$0xff]
    %v172 = vld [vmem:[#allocation2 + $0x8] sm:$0xff]
    %v173 = vld [vmem:[#allocation2 + $0x10] sm:$0xff]
    %v174 = vld [vmem:[#allocation2 + $0x18] sm:$0xff]
    %v175 = vld [vmem:[#allocation2 + $0x20] sm:$0xff]
    %v176 = vld [vmem:[#allocation2 + $0x28] sm:$0xff]
    %v177 = vld [vmem:[#allocation2 + $0x30] sm:$0xff]
    %v178 = vld [vmem:[#allocation2 + $0x38] sm:$0xff]
    %v179 = vadd.f32 %v171, %v163
    %v180 = vadd.f32 %v172, %v164
    %v181 = vadd.f32 %v173, %v165
    %v182 = vadd.f32 %v174, %v166
    %v183 = vadd.f32 %v175, %v167
    %v184 = vadd.f32 %v176, %v168
    %v185 = vadd.f32 %v177, %v169
    %v186 = vadd.f32 %v178, %v170
    %187 = vst [vmem:[#allocation2] sm:$0xff] %v179
    %188 = vst [vmem:[#allocation2 + $0x8] sm:$0xff] %v180
    %189 = vst [vmem:[#allocation2 + $0x10] sm:$0xff] %v181
    %190 = vst [vmem:[#allocation2 + $0x18] sm:$0xff] %v182
    %191 = vst [vmem:[#allocation2 + $0x20] sm:$0xff] %v183
    %192 = vst [vmem:[#allocation2 + $0x28] sm:$0xff] %v184
    %193 = vst [vmem:[#allocation2 + $0x30] sm:$0xff] %v185
    %194 = vst [vmem:[#allocation2 + $0x38] sm:$0xff] %v186
    %v195 = vld [vmem:[#allocation3] sm:$0xff]
    %v196 = vld [vmem:[#allocation3 + $0x8] sm:$0xff]
    %v197 = vld [vmem:[#allocation3 + $0x10] sm:$0xff]
    %v198 = vld [vmem:[#allocation3 + $0x18] sm:$0xff]
    %v199 = vld [vmem:[#allocation3 + $0x20] sm:$0xff]
    %v200 = vld [vmem:[#allocation3 + $0x28] sm:$0xff]
    %v201 = vld [vmem:[#allocation3 + $0x30] sm:$0xff]
    %v202 = vld [vmem:[#allocation3 + $0x38] sm:$0xff]
    %v203 = vmin.f32 %v195, %v163
    %v204 = vmin.f32 %v196, %v164
    %v205 = vmin.f32 %v197, %v165
    %v206 = vmin.f32 %v198, %v166
    %v207 = vmin.f32 %v199, %v167
    %v208 = vmin.f32 %v200, %v168
    %v209 = vmin.f32 %v201, %v169
    %v210 = vmin.f32 %v202, %v170
    %211 = vst [vmem:[#allocation3] sm:$0xff] %v203
    %212 = vst [vmem:[#allocation3 + $0x8] sm:$0xff] %v204
    %213 = vst [vmem:[#allocation3 + $0x10] sm:$0xff] %v205
    %214 = vst [vmem:[#allocation3 + $0x18] sm:$0xff] %v206
    %215 = vst [vmem:[#allocation3 + $0x20] sm:$0xff] %v207
    %216 = vst [vmem:[#allocation3 + $0x28] sm:$0xff] %v208
    %217 = vst [vmem:[#allocation3 + $0x30] sm:$0xff] %v209
    %218 = vst [vmem:[#allocation3 + $0x38] sm:$0xff] %v210
    %v219 = vld [vmem:[#allocation4 + $0x18] sm:$0xff]
    %v220 = vld [vmem:[#allocation4 + $0x58] sm:$0xff]
    %v221 = vld [vmem:[#allocation4 + $0x98] sm:$0xff]
    %v222 = vld [vmem:[#allocation4 + $0xd8] sm:$0xff]
    %v223 = vld [vmem:[#allocation4 + $0x118] sm:$0xff]
    %v224 = vld [vmem:[#allocation4 + $0x158] sm:$0xff]
    %v225 = vld [vmem:[#allocation4 + $0x198] sm:$0xff]
    %v226 = vld [vmem:[#allocation4 + $0x1d8] sm:$0xff]
    %v227 = vld [vmem:[#allocation2] sm:$0xff]
    %v228 = vld [vmem:[#allocation2 + $0x8] sm:$0xff]
    %v229 = vld [vmem:[#allocation2 + $0x10] sm:$0xff]
    %v230 = vld [vmem:[#allocation2 + $0x18] sm:$0xff]
    %v231 = vld [vmem:[#allocation2 + $0x20] sm:$0xff]
    %v232 = vld [vmem:[#allocation2 + $0x28] sm:$0xff]
    %v233 = vld [vmem:[#allocation2 + $0x30] sm:$0xff]
    %v234 = vld [vmem:[#allocation2 + $0x38] sm:$0xff]
    %v235 = vadd.f32 %v227, %v219
    %v236 = vadd.f32 %v228, %v220
    %v237 = vadd.f32 %v229, %v221
    %v238 = vadd.f32 %v230, %v222
    %v239 = vadd.f32 %v231, %v223
    %v240 = vadd.f32 %v232, %v224
    %v241 = vadd.f32 %v233, %v225
    %v242 = vadd.f32 %v234, %v226
    %243 = vst [vmem:[#allocation2] sm:$0xff] %v235
    %244 = vst [vmem:[#allocation2 + $0x8] sm:$0xff] %v236
    %245 = vst [vmem:[#allocation2 + $0x10] sm:$0xff] %v237
    %246 = vst [vmem:[#allocation2 + $0x18] sm:$0xff] %v238
    %247 = vst [vmem:[#allocation2 + $0x20] sm:$0xff] %v239
    %248 = vst [vmem:[#allocation2 + $0x28] sm:$0xff] %v240
    %249 = vst [vmem:[#allocation2 + $0x30] sm:$0xff] %v241
    %250 = vst [vmem:[#allocation2 + $0x38] sm:$0xff] %v242
    %v251 = vld [vmem:[#allocation3] sm:$0xff]
    %v252 = vld [vmem:[#allocation3 + $0x8] sm:$0xff]
    %v253 = vld [vmem:[#allocation3 + $0x10] sm:$0xff]
    %v254 = vld [vmem:[#allocation3 + $0x18] sm:$0xff]
    %v255 = vld [vmem:[#allocation3 + $0x20] sm:$0xff]
    %v256 = vld [vmem:[#allocation3 + $0x28] sm:$0xff]
    %v257 = vld [vmem:[#allocation3 + $0x30] sm:$0xff]
    %v258 = vld [vmem:[#allocation3 + $0x38] sm:$0xff]
    %v259 = vmin.f32 %v251, %v219
    %v260 = vmin.f32 %v252, %v220
    %v261 = vmin.f32 %v253, %v221
    %v262 = vmin.f32 %v254, %v222
    %v263 = vmin.f32 %v255, %v223
    %v264 = vmin.f32 %v256, %v224
    %v265 = vmin.f32 %v257, %v225
    %v266 = vmin.f32 %v258, %v226
    %267 = vst [vmem:[#allocation3] sm:$0xff] %v259
    %268 = vst [vmem:[#allocation3 + $0x8] sm:$0xff] %v260
    %269 = vst [vmem:[#allocation3 + $0x10] sm:$0xff] %v261
    %270 = vst [vmem:[#allocation3 + $0x18] sm:$0xff] %v262
    %271 = vst [vmem:[#allocation3 + $0x20] sm:$0xff] %v263
    %272 = vst [vmem:[#allocation3 + $0x28] sm:$0xff] %v264
    %273 = vst [vmem:[#allocation3 + $0x30] sm:$0xff] %v265
    %274 = vst [vmem:[#allocation3 + $0x38] sm:$0xff] %v266
    %v275 = vld [vmem:[#allocation4 + $0x20] sm:$0xff]
    %v276 = vld [vmem:[#allocation4 + $0x60] sm:$0xff]
    %v277 = vld [vmem:[#allocation4 + $0xa0] sm:$0xff]
    %v278 = vld [vmem:[#allocation4 + $0xe0] sm:$0xff]
    %v279 = vld [vmem:[#allocation4 + $0x120] sm:$0xff]
    %v280 = vld [vmem:[#allocation4 + $0x160] sm:$0xff]
    %v281 = vld [vmem:[#allocation4 + $0x1a0] sm:$0xff]
    %v282 = vld [vmem:[#allocation4 + $0x1e0] sm:$0xff]
    %v283 = vld [vmem:[#allocation2] sm:$0xff]
    %v284 = vld [vmem:[#allocation2 + $0x8] sm:$0xff]
    %v285 = vld [vmem:[#allocation2 + $0x10] sm:$0xff]
    %v286 = vld [vmem:[#allocation2 + $0x18] sm:$0xff]
    %v287 = vld [vmem:[#allocation2 + $0x20] sm:$0xff]
    %v288 = vld [vmem:[#allocation2 + $0x28] sm:$0xff]
    %v289 = vld [vmem:[#allocation2 + $0x30] sm:$0xff]
    %v290 = vld [vmem:[#allocation2 + $0x38] sm:$0xff]
    %v291 = vadd.f32 %v283, %v275
    %v292 = vadd.f32 %v284, %v276
    %v293 = vadd.f32 %v285, %v277
    %v294 = vadd.f32 %v286, %v278
    %v295 = vadd.f32 %v287, %v279
    %v296 = vadd.f32 %v288, %v280
    %v297 = vadd.f32 %v289, %v281
    %v298 = vadd.f32 %v290, %v282
    %299 = vst [vmem:[#allocation2] sm:$0xff] %v291
    %300 = vst [vmem:[#allocation2 + $0x8] sm:$0xff] %v292
    %301 = vst [vmem:[#allocation2 + $0x10] sm:$0xff] %v293
    %302 = vst [vmem:[#allocation2 + $0x18] sm:$0xff] %v294
    %303 = vst [vmem:[#allocation2 + $0x20] sm:$0xff] %v295
    %304 = vst [vmem:[#allocation2 + $0x28] sm:$0xff] %v296
    %305 = vst [vmem:[#allocation2 + $0x30] sm:$0xff] %v297
    %306 = vst [vmem:[#allocation2 + $0x38] sm:$0xff] %v298
    %v307 = vld [vmem:[#allocation3] sm:$0xff]
    %v308 = vld [vmem:[#allocation3 + $0x8] sm:$0xff]
    %v309 = vld [vmem:[#allocation3 + $0x10] sm:$0xff]
    %v310 = vld [vmem:[#allocation3 + $0x18] sm:$0xff]
    %v311 = vld [vmem:[#allocation3 + $0x20] sm:$0xff]
    %v312 = vld [vmem:[#allocation3 + $0x28] sm:$0xff]
    %v313 = vld [vmem:[#allocation3 + $0x30] sm:$0xff]
    %v314 = vld [vmem:[#allocation3 + $0x38] sm:$0xff]
    %v315 = vmin.f32 %v307, %v275
    %v316 = vmin.f32 %v308, %v276
    %v317 = vmin.f32 %v309, %v277
    %v318 = vmin.f32 %v310, %v278
    %v319 = vmin.f32 %v311, %v279
    %v320 = vmin.f32 %v312, %v280
    %v321 = vmin.f32 %v313, %v281
    %v322 = vmin.f32 %v314, %v282
    %323 = vst [vmem:[#allocation3] sm:$0xff] %v315
    %324 = vst [vmem:[#allocation3 + $0x8] sm:$0xff] %v316
    %325 = vst [vmem:[#allocation3 + $0x10] sm:$0xff] %v317
    %326 = vst [vmem:[#allocation3 + $0x18] sm:$0xff] %v318
    %327 = vst [vmem:[#allocation3 + $0x20] sm:$0xff] %v319
    %328 = vst [vmem:[#allocation3 + $0x28] sm:$0xff] %v320
    %329 = vst [vmem:[#allocation3 + $0x30] sm:$0xff] %v321
    %330 = vst [vmem:[#allocation3 + $0x38] sm:$0xff] %v322
    %v331 = vld [vmem:[#allocation4 + $0x28] sm:$0xff]
    %v332 = vld [vmem:[#allocation4 + $0x68] sm:$0xff]
    %v333 = vld [vmem:[#allocation4 + $0xa8] sm:$0xff]
    %v334 = vld [vmem:[#allocation4 + $0xe8] sm:$0xff]
    %v335 = vld [vmem:[#allocation4 + $0x128] sm:$0xff]
    %v336 = vld [vmem:[#allocation4 + $0x168] sm:$0xff]
    %v337 = vld [vmem:[#allocation4 + $0x1a8] sm:$0xff]
    %v338 = vld [vmem:[#allocation4 + $0x1e8] sm:$0xff]
    %v339 = vld [vmem:[#allocation2] sm:$0xff]
    %v340 = vld [vmem:[#allocation2 + $0x8] sm:$0xff]
    %v341 = vld [vmem:[#allocation2 + $0x10] sm:$0xff]
    %v342 = vld [vmem:[#allocation2 + $0x18] sm:$0xff]
    %v343 = vld [vmem:[#allocation2 + $0x20] sm:$0xff]
    %v344 = vld [vmem:[#allocation2 + $0x28] sm:$0xff]
    %v345 = vld [vmem:[#allocation2 + $0x30] sm:$0xff]
    %v346 = vld [vmem:[#allocation2 + $0x38] sm:$0xff]
    %v347 = vadd.f32 %v339, %v331
    %v348 = vadd.f32 %v340, %v332
    %v349 = vadd.f32 %v341, %v333
    %v350 = vadd.f32 %v342, %v334
    %v351 = vadd.f32 %v343, %v335
    %v352 = vadd.f32 %v344, %v336
    %v353 = vadd.f32 %v345, %v337
    %v354 = vadd.f32 %v346, %v338
    %355 = vst [vmem:[#allocation2] sm:$0xff] %v347
    %356 = vst [vmem:[#allocation2 + $0x8] sm:$0xff] %v348
    %357 = vst [vmem:[#allocation2 + $0x10] sm:$0xff] %v349
    %358 = vst [vmem:[#allocation2 + $0x18] sm:$0xff] %v350
    %359 = vst [vmem:[#allocation2 + $0x20] sm:$0xff] %v351
    %360 = vst [vmem:[#allocation2 + $0x28] sm:$0xff] %v352
    %361 = vst [vmem:[#allocation2 + $0x30] sm:$0xff] %v353
    %362 = vst [vmem:[#allocation2 + $0x38] sm:$0xff] %v354
    %v363 = vld [vmem:[#allocation3] sm:$0xff]
    %v364 = vld [vmem:[#allocation3 + $0x8] sm:$0xff]
    %v365 = vld [vmem:[#allocation3 + $0x10] sm:$0xff]
    %v366 = vld [vmem:[#allocation3 + $0x18] sm:$0xff]
    %v367 = vld [vmem:[#allocation3 + $0x20] sm:$0xff]
    %v368 = vld [vmem:[#allocation3 + $0x28] sm:$0xff]
    %v369 = vld [vmem:[#allocation3 + $0x30] sm:$0xff]
    %v370 = vld [vmem:[#allocation3 + $0x38] sm:$0xff]
    %v371 = vmin.f32 %v363, %v331
    %v372 = vmin.f32 %v364, %v332
    %v373 = vmin.f32 %v365, %v333
    %v374 = vmin.f32 %v366, %v334
    %v375 = vmin.f32 %v367, %v335
    %v376 = vmin.f32 %v368, %v336
    %v377 = vmin.f32 %v369, %v337
    %v378 = vmin.f32 %v370, %v338
    %379 = vst [vmem:[#allocation3] sm:$0xff] %v371
    %380 = vst [vmem:[#allocation3 + $0x8] sm:$0xff] %v372
    %381 = vst [vmem:[#allocation3 + $0x10] sm:$0xff] %v373
    %382 = vst [vmem:[#allocation3 + $0x18] sm:$0xff] %v374
    %383 = vst [vmem:[#allocation3 + $0x20] sm:$0xff] %v375
    %384 = vst [vmem:[#allocation3 + $0x28] sm:$0xff] %v376
    %385 = vst [vmem:[#allocation3 + $0x30] sm:$0xff] %v377
    %386 = vst [vmem:[#allocation3 + $0x38] sm:$0xff] %v378
    %v387 = vld [vmem:[#allocation4 + $0x30] sm:$0xff]
    %v388 = vld [vmem:[#allocation4 + $0x70] sm:$0xff]
    %v389 = vld [vmem:[#allocation4 + $0xb0] sm:$0xff]
    %v390 = vld [vmem:[#allocation4 + $0xf0] sm:$0xff]
    %v391 = vld [vmem:[#allocation4 + $0x130] sm:$0xff]
    %v392 = vld [vmem:[#allocation4 + $0x170] sm:$0xff]
    %v393 = vld [vmem:[#allocation4 + $0x1b0] sm:$0xff]
    %v394 = vld [vmem:[#allocation4 + $0x1f0] sm:$0xff]
    %v395 = vld [vmem:[#allocation2] sm:$0xff]
    %v396 = vld [vmem:[#allocation2 + $0x8] sm:$0xff]
    %v397 = vld [vmem:[#allocation2 + $0x10] sm:$0xff]
    %v398 = vld [vmem:[#allocation2 + $0x18] sm:$0xff]
    %v399 = vld [vmem:[#allocation2 + $0x20] sm:$0xff]
    %v400 = vld [vmem:[#allocation2 + $0x28] sm:$0xff]
    %v401 = vld [vmem:[#allocation2 + $0x30] sm:$0xff]
    %v402 = vld [vmem:[#allocation2 + $0x38] sm:$0xff]
    %v403 = vadd.f32 %v395, %v387
    %v404 = vadd.f32 %v396, %v388
    %v405 = vadd.f32 %v397, %v389
    %v406 = vadd.f32 %v398, %v390
    %v407 = vadd.f32 %v399, %v391
    %v408 = vadd.f32 %v400, %v392
    %v409 = vadd.f32 %v401, %v393
    %v410 = vadd.f32 %v402, %v394
    %411 = vst [vmem:[#allocation2] sm:$0xff] %v403
    %412 = vst [vmem:[#allocation2 + $0x8] sm:$0xff] %v404
    %413 = vst [vmem:[#allocation2 + $0x10] sm:$0xff] %v405
    %414 = vst [vmem:[#allocation2 + $0x18] sm:$0xff] %v406
    %415 = vst [vmem:[#allocation2 + $0x20] sm:$0xff] %v407
    %416 = vst [vmem:[#allocation2 + $0x28] sm:$0xff] %v408
    %417 = vst [vmem:[#allocation2 + $0x30] sm:$0xff] %v409
    %418 = vst [vmem:[#allocation2 + $0x38] sm:$0xff] %v410
    %v419 = vld [vmem:[#allocation3] sm:$0xff]
    %v420 = vld [vmem:[#allocation3 + $0x8] sm:$0xff]
    %v421 = vld [vmem:[#allocation3 + $0x10] sm:$0xff]
    %v422 = vld [vmem:[#allocation3 + $0x18] sm:$0xff]
    %v423 = vld [vmem:[#allocation3 + $0x20] sm:$0xff]
    %v424 = vld [vmem:[#allocation3 + $0x28] sm:$0xff]
    %v425 = vld [vmem:[#allocation3 + $0x30] sm:$0xff]
    %v426 = vld [vmem:[#allocation3 + $0x38] sm:$0xff]
    %v427 = vmin.f32 %v419, %v387
    %v428 = vmin.f32 %v420, %v388
    %v429 = vmin.f32 %v421, %v389
    %v430 = vmin.f32 %v422, %v390
    %v431 = vmin.f32 %v423, %v391
    %v432 = vmin.f32 %v424, %v392
    %v433 = vmin.f32 %v425, %v393
    %v434 = vmin.f32 %v426, %v394
    %435 = vst [vmem:[#allocation3] sm:$0xff] %v427
    %436 = vst [vmem:[#allocation3 + $0x8] sm:$0xff] %v428
    %437 = vst [vmem:[#allocation3 + $0x10] sm:$0xff] %v429
    %438 = vst [vmem:[#allocation3 + $0x18] sm:$0xff] %v430
    %439 = vst [vmem:[#allocation3 + $0x20] sm:$0xff] %v431
    %440 = vst [vmem:[#allocation3 + $0x28] sm:$0xff] %v432
    %441 = vst [vmem:[#allocation3 + $0x30] sm:$0xff] %v433
    %442 = vst [vmem:[#allocation3 + $0x38] sm:$0xff] %v434
    %v443 = vld [vmem:[#allocation4 + $0x38] sm:$0xff]
    %v444 = vld [vmem:[#allocation4 + $0x78] sm:$0xff]
    %v445 = vld [vmem:[#allocation4 + $0xb8] sm:$0xff]
    %v446 = vld [vmem:[#allocation4 + $0xf8] sm:$0xff]
    %v447 = vld [vmem:[#allocation4 + $0x138] sm:$0xff]
    %v448 = vld [vmem:[#allocation4 + $0x178] sm:$0xff]
    %v449 = vld [vmem:[#allocation4 + $0x1b8] sm:$0xff]
    %v450 = vld [vmem:[#allocation4 + $0x1f8] sm:$0xff]
    %v451 = vld [vmem:[#allocation2] sm:$0xff]
    %v452 = vld [vmem:[#allocation2 + $0x8] sm:$0xff]
    %v453 = vld [vmem:[#allocation2 + $0x10] sm:$0xff]
    %v454 = vld [vmem:[#allocation2 + $0x18] sm:$0xff]
    %v455 = vld [vmem:[#allocation2 + $0x20] sm:$0xff]
    %v456 = vld [vmem:[#allocation2 + $0x28] sm:$0xff]
    %v457 = vld [vmem:[#allocation2 + $0x30] sm:$0xff]
    %v458 = vld [vmem:[#allocation2 + $0x38] sm:$0xff]
    %v459 = vadd.f32 %v451, %v443
    %v460 = vadd.f32 %v452, %v444
    %v461 = vadd.f32 %v453, %v445
    %v462 = vadd.f32 %v454, %v446
    %v463 = vadd.f32 %v455, %v447
    %v464 = vadd.f32 %v456, %v448
    %v465 = vadd.f32 %v457, %v449
    %v466 = vadd.f32 %v458, %v450
    %467 = vst [vmem:[#allocation2] sm:$0xff] %v459
    %468 = vst [vmem:[#allocation2 + $0x8] sm:$0xff] %v460
    %469 = vst [vmem:[#allocation2 + $0x10] sm:$0xff] %v461
    %470 = vst [vmem:[#allocation2 + $0x18] sm:$0xff] %v462
    %471 = vst [vmem:[#allocation2 + $0x20] sm:$0xff] %v463
    %472 = vst [vmem:[#allocation2 + $0x28] sm:$0xff] %v464
    %473 = vst [vmem:[#allocation2 + $0x30] sm:$0xff] %v465
    %474 = vst [vmem:[#allocation2 + $0x38] sm:$0xff] %v466
    %v475 = vld [vmem:[#allocation3] sm:$0xff]
    %v476 = vld [vmem:[#allocation3 + $0x8] sm:$0xff]
    %v477 = vld [vmem:[#allocation3 + $0x10] sm:$0xff]
    %v478 = vld [vmem:[#allocation3 + $0x18] sm:$0xff]
    %v479 = vld [vmem:[#allocation3 + $0x20] sm:$0xff]
    %v480 = vld [vmem:[#allocation3 + $0x28] sm:$0xff]
    %v481 = vld [vmem:[#allocation3 + $0x30] sm:$0xff]
    %v482 = vld [vmem:[#allocation3 + $0x38] sm:$0xff]
    %v483 = vmin.f32 %v475, %v443
    %v484 = vmin.f32 %v476, %v444
    %v485 = vmin.f32 %v477, %v445
    %v486 = vmin.f32 %v478, %v446
    %v487 = vmin.f32 %v479, %v447
    %v488 = vmin.f32 %v480, %v448
    %v489 = vmin.f32 %v481, %v449
    %v490 = vmin.f32 %v482, %v450
    %491 = vst [vmem:[#allocation3] sm:$0xff] %v483
    %492 = vst [vmem:[#allocation3 + $0x8] sm:$0xff] %v484
    %493 = vst [vmem:[#allocation3 + $0x10] sm:$0xff] %v485
    %494 = vst [vmem:[#allocation3 + $0x18] sm:$0xff] %v486
    %495 = vst [vmem:[#allocation3 + $0x20] sm:$0xff] %v487
    %496 = vst [vmem:[#allocation3 + $0x28] sm:$0xff] %v488
    %497 = vst [vmem:[#allocation3 + $0x30] sm:$0xff] %v489
    %498 = vst [vmem:[#allocation3 + $0x38] sm:$0xff] %v490
    %v499 = vld [vmem:[#allocation2] sm:$0xff]
    %v500 = vld [vmem:[#allocation2 + $0x8] sm:$0xff]
    %v501 = vld [vmem:[#allocation2 + $0x10] sm:$0xff]
    %v502 = vld [vmem:[#allocation2 + $0x18] sm:$0xff]
    %v503 = vld [vmem:[#allocation2 + $0x20] sm:$0xff]
    %v504 = vld [vmem:[#allocation2 + $0x28] sm:$0xff]
    %v505 = vld [vmem:[#allocation2 + $0x30] sm:$0xff]
    %v506 = vld [vmem:[#allocation2 + $0x38] sm:$0xff]
    %507 = vadd.xlane.f32.xlu0 %v499
    %v508 = vpop.xlane.xlu0 %507
    %509 = vadd.xlane.f32.xlu0 %v500
    %v510 = vpop.xlane.xlu0 %509
    %511 = vadd.xlane.f32.xlu0 %v501
    %v512 = vpop.xlane.xlu0 %511
    %513 = vadd.xlane.f32.xlu0 %v502
    %v514 = vpop.xlane.xlu0 %513
    %515 = vadd.xlane.f32.xlu0 %v503
    %v516 = vpop.xlane.xlu0 %515
    %517 = vadd.xlane.f32.xlu0 %v504
    %v518 = vpop.xlane.xlu0 %517
    %519 = vadd.xlane.f32.xlu0 %v505
    %v520 = vpop.xlane.xlu0 %519
    %521 = vadd.xlane.f32.xlu0 %v506
    %v522 = vpop.xlane.xlu0 %521
    %v523 = vmul.f32 %v508, 0.0009765625
    %v524 = vmul.f32 %v510, 0.0009765625
    %v525 = vmul.f32 %v512, 0.0009765625
    %v526 = vmul.f32 %v514, 0.0009765625
    %v527 = vmul.f32 %v516, 0.0009765625
    %v528 = vmul.f32 %v518, 0.0009765625
    %v529 = vmul.f32 %v520, 0.0009765625
    %v530 = vmul.f32 %v522, 0.0009765625
    %v531 = vld [vmem:[#allocation3] sm:$0xff]
    %v532 = vld [vmem:[#allocation3 + $0x8] sm:$0xff]
    %v533 = vld [vmem:[#allocation3 + $0x10] sm:$0xff]
    %v534 = vld [vmem:[#allocation3 + $0x18] sm:$0xff]
    %v535 = vld [vmem:[#allocation3 + $0x20] sm:$0xff]
    %v536 = vld [vmem:[#allocation3 + $0x28] sm:$0xff]
    %v537 = vld [vmem:[#allocation3 + $0x30] sm:$0xff]
    %v538 = vld [vmem:[#allocation3 + $0x38] sm:$0xff]
    %539 = vmin.xlane.f32.xlu0 %v531
    %v540 = vpop.xlane.xlu0 %539
    %541 = vmin.xlane.f32.xlu0 %v532
    %v542 = vpop.xlane.xlu0 %541
    %543 = vmin.xlane.f32.xlu0 %v533
    %v544 = vpop.xlane.xlu0 %543
    %545 = vmin.xlane.f32.xlu0 %v534
    %v546 = vpop.xlane.xlu0 %545
    %547 = vmin.xlane.f32.xlu0 %v535
    %v548 = vpop.xlane.xlu0 %547
    %549 = vmin.xlane.f32.xlu0 %v536
    %v550 = vpop.xlane.xlu0 %549
    %551 = vmin.xlane.f32.xlu0 %v537
    %v552 = vpop.xlane.xlu0 %551
    %553 = vmin.xlane.f32.xlu0 %v538
    %v554 = vpop.xlane.xlu0 %553
    %v563 = vlaneseq
    %v564 = vand.u32 %v563, 127
    %v565 = vlaneseq
    %v566 = vshrl.u32 %v565, 7
    %v567 = vsub.s32 %v564, %v566
    %v568 = vrot.slane %v523, %v567
    %v569 = vadd.s32 %v564, 4294967288
    %v570 = vlaneseq
    %v571 = vshrl.u32 %v570, 7
    %v572 = vsub.s32 %v569, %v571
    %v573 = vrot.slane %v524, %v572
    %vm574 = vcmask 130112
    %v575 = vsel %vm574, %v573, %v568
    %v576 = vadd.s32 %v564, 4294967280
    %v577 = vlaneseq
    %v578 = vshrl.u32 %v577, 7
    %v579 = vsub.s32 %v576, %v578
    %v580 = vrot.slane %v525, %v579
    %vm581 = vcmask 195712
    %v582 = vsel %vm581, %v580, %v575
    %v583 = vadd.s32 %v564, 4294967272
    %v584 = vlaneseq
    %v585 = vshrl.u32 %v584, 7
    %v586 = vsub.s32 %v583, %v585
    %v587 = vrot.slane %v526, %v586
    %vm588 = vcmask 261312
    %v589 = vsel %vm588, %v587, %v582
    %v590 = vlaneseq
    %v591 = vshrl.u32 %v590, 7
    %v592 = vsub.s32 %v564, %v591
    %v593 = vrot.slane %v527, %v592
    %v594 = vlaneseq
    %v595 = vshrl.u32 %v594, 7
    %v596 = vsub.s32 %v569, %v595
    %v597 = vrot.slane %v528, %v596
    %v598 = vsel %vm574, %v597, %v593
    %v599 = vlaneseq
    %v600 = vshrl.u32 %v599, 7
    %v601 = vsub.s32 %v576, %v600
    %v602 = vrot.slane %v529, %v601
    %v603 = vsel %vm581, %v602, %v598
    %v604 = vlaneseq
    %v605 = vshrl.u32 %v604, 7
    %v606 = vsub.s32 %v583, %v605
    %v607 = vrot.slane %v530, %v606
    %v608 = vsel %vm588, %v607, %v603
    %vm609 = vcmask 1041409
    %v610 = vsel %vm609, %v608, %v589
    %v620 = vlaneseq
    %v621 = vshrl.u32 %v620, 7
    %v622 = vsub.s32 %v564, %v621
    %v623 = vrot.slane %v540, %v622
    %v624 = vlaneseq
    %v625 = vshrl.u32 %v624, 7
    %v626 = vsub.s32 %v569, %v625
    %v627 = vrot.slane %v542, %v626
    %v628 = vsel %vm574, %v627, %v623
    %v629 = vlaneseq
    %v630 = vshrl.u32 %v629, 7
    %v631 = vsub.s32 %v576, %v630
    %v632 = vrot.slane %v544, %v631
    %v633 = vsel %vm581, %v632, %v628
    %v634 = vlaneseq
    %v635 = vshrl.u32 %v634, 7
    %v636 = vsub.s32 %v583, %v635
    %v637 = vrot.slane %v546, %v636
    %v638 = vsel %vm588, %v637, %v633
    %v639 = vlaneseq
    %v640 = vshrl.u32 %v639, 7
    %v641 = vsub.s32 %v564, %v640
    %v642 = vrot.slane %v548, %v641
    %v643 = vlaneseq
    %v644 = vshrl.u32 %v643, 7
    %v645 = vsub.s32 %v569, %v644
    %v646 = vrot.slane %v550, %v645
    %v647 = vsel %vm574, %v646, %v642
    %v648 = vlaneseq
    %v649 = vshrl.u32 %v648, 7
    %v650 = vsub.s32 %v576, %v649
    %v651 = vrot.slane %v552, %v650
    %v652 = vsel %vm581, %v651, %v647
    %v653 = vlaneseq
    %v654 = vshrl.u32 %v653, 7
    %v655 = vsub.s32 %v583, %v654
    %v656 = vrot.slane %v554, %v655
    %v657 = vsel %vm588, %v656, %v652
    %vm658 = vcmask 1043459
    %v659 = vsel %vm658, %v657, %v638
    %vm661 = vcmask 1041408
    %v662 = vsel %vm661, %v610, %v659
    %v663 = vld [vmem:[%s1] sm:$0xff]
    %v664 = vld [vmem:[%s1 + $0x8] sm:$0xff]
    %v665 = vld [vmem:[%s1 + $0x10] sm:$0xff]
    %v666 = vld [vmem:[%s1 + $0x18] sm:$0xff]
    %v667 = vld [vmem:[%s2] sm:$0x1]
    %v669 = vlaneseq
    %v670 = vshrl.u32 %v669, 7
    %v671 = vsub.s32 0, %v670
    %v672 = vrot.slane %v667, %v671
    %vm674 = vcmask 261120
    %v676 = vsel %vm674, %v662, 0
    %678 = vmatprep.subr.mxu0 0.0
    %679 = vmatpush1.msra.mxu0 0.0
    %680 = vmatprep.subr.mxu0 0.0
    %681 = vmatpush1.msra.mxu0 0.0
    %682 = vmatprep.subr.mxu0 0.0
    %683 = vmatpush1.msra.mxu0 0.0
    %684 = vmatprep.subr.mxu0 0.0
    %685 = vmatpush1.msra.mxu0 0.0
    %686 = vmatprep.subr.mxu0 0.0
    %687 = vmatpush1.msra.mxu0 0.0
    %688 = vmatprep.subr.mxu0 0.0
    %689 = vmatpush1.msra.mxu0 0.0
    %690 = vmatprep.subr.mxu0 0.0
    %691 = vmatpush1.msra.mxu0 0.0
    %692 = vmatprep.subr.mxu0 0.0
    %693 = vmatpush1.msra.mxu0 0.0
    %694 = vmatprep.subr.mxu0 0.0
    %695 = vmatpush1.msra.mxu0 0.0
    %696 = vmatprep.subr.mxu0 0.0
    %697 = vmatpush1.msra.mxu0 0.0
    %698 = vmatprep.subr.mxu0 0.0
    %699 = vmatpush1.msra.mxu0 0.0
    %700 = vmatprep.subr.mxu0 0.0
    %701 = vmatpush1.msra.mxu0 0.0
    %702 = vmatprep.subr.mxu0 0.0
    %703 = vmatpush1.msra.mxu0 %v666
    %704 = vmatprep.subr.mxu0 0.0
    %705 = vmatpush1.msra.mxu0 %v665
    %706 = vmatprep.subr.mxu0 0.0
    %707 = vmatpush1.msra.mxu0 %v664
    %708 = vmatprep.subr.mxu0 0.0
    %709 = vmatpush1.msra.mxu0 %v663
    %710 = vmatprep.subr.mxu0 0.0
    %711 = vmatpush2.msra.mxu0 0.0
    %712 = vmatprep.subr.mxu0 0.0
    %713 = vmatpush2.msra.mxu0 0.0
    %714 = vmatprep.subr.mxu0 0.0
    %715 = vmatpush2.msra.mxu0 0.0
    %716 = vmatprep.subr.mxu0 0.0
    %717 = vmatpush2.msra.mxu0 0.0
    %718 = vmatprep.subr.mxu0 0.0
    %719 = vmatpush2.msra.mxu0 0.0
    %720 = vmatprep.subr.mxu0 0.0
    %721 = vmatpush2.msra.mxu0 0.0
    %722 = vmatprep.subr.mxu0 0.0
    %723 = vmatpush2.msra.mxu0 0.0
    %724 = vmatprep.subr.mxu0 0.0
    %725 = vmatpush2.msra.mxu0 0.0
    %726 = vmatprep.subr.mxu0 0.0
    %727 = vmatpush2.msra.mxu0 0.0
    %728 = vmatprep.subr.mxu0 0.0
    %729 = vmatpush2.msra.mxu0 0.0
    %730 = vmatprep.subr.mxu0 0.0
    %731 = vmatpush2.msra.mxu0 0.0
    %732 = vmatprep.subr.mxu0 0.0
    %733 = vmatpush2.msra.mxu0 0.0
    %734 = vmatprep.subr.mxu0 0.0
    %735 = vmatpush2.msra.mxu0 0.0
    %736 = vmatprep.subr.mxu0 0.0
    %737 = vmatpush2.msra.mxu0 0.0
    %738 = vmatprep.subr.mxu0 0.0
    %739 = vmatpush2.msra.mxu0 0.0
    %740 = vmatprep.subr.mxu0 0.0
    %741 = vmatpush2.msra.mxu0 0.0
    %742 = vmatprep.mubr.f32.mxu0 0.0
    %743 = vmatmul.mubr.f32.gmra.mxu0 %v676
    %v744 = vpop.f32.mrf.mxu0
    %v745 = vadd.f32 %v672, %v744
    %v746 = vpop.f32.mrf.mxu0
    %747 = vdwg.mxu0
    %v748 = vmax.f32 %v745, 0.0
    %v749 = vld [vmem:[%s3] sm:$0x3]
    %v750 = vld [vmem:[%s4] sm:$0x1]
    %v752 = vlaneseq
    %v753 = vshrl.u32 %v752, 7
    %v754 = vsub.s32 0, %v753
    %v755 = vrot.slane %v750, %v754
    %vm757 = vcmask 15360
    %v759 = vsel %vm757, %v748, 0
    %v762 = vsel %vm661, %v749, 0
    %764 = vmatprep.subr.mxu0 0.0
    %765 = vmatpush1.msra.mxu0 0.0
    %766 = vmatprep.subr.mxu0 0.0
    %767 = vmatpush1.msra.mxu0 0.0
    %768 = vmatprep.subr.mxu0 0.0
    %769 = vmatpush1.msra.mxu0 0.0
    %770 = vmatprep.subr.mxu0 0.0
    %771 = vmatpush1.msra.mxu0 0.0
    %772 = vmatprep.subr.mxu0 0.0
    %773 = vmatpush1.msra.mxu0 0.0
    %774 = vmatprep.subr.mxu0 0.0
    %775 = vmatpush1.msra.mxu0 0.0
    %776 = vmatprep.subr.mxu0 0.0
    %777 = vmatpush1.msra.mxu0 0.0
    %778 = vmatprep.subr.mxu0 0.0
    %779 = vmatpush1.msra.mxu0 0.0
    %780 = vmatprep.subr.mxu0 0.0
    %781 = vmatpush1.msra.mxu0 0.0
    %782 = vmatprep.subr.mxu0 0.0
    %783 = vmatpush1.msra.mxu0 0.0
    %784 = vmatprep.subr.mxu0 0.0
    %785 = vmatpush1.msra.mxu0 0.0
    %786 = vmatprep.subr.mxu0 0.0
    %787 = vmatpush1.msra.mxu0 0.0
    %788 = vmatprep.subr.mxu0 0.0
    %789 = vmatpush1.msra.mxu0 0.0
    %790 = vmatprep.subr.mxu0 0.0
    %791 = vmatpush1.msra.mxu0 0.0
    %792 = vmatprep.subr.mxu0 0.0
    %793 = vmatpush1.msra.mxu0 0.0
    %794 = vmatprep.subr.mxu0 0.0
    %795 = vmatpush1.msra.mxu0 %v762
    %796 = vmatprep.subr.mxu0 0.0
    %797 = vmatpush2.msra.mxu0 0.0
    %798 = vmatprep.subr.mxu0 0.0
    %799 = vmatpush2.msra.mxu0 0.0
    %800 = vmatprep.subr.mxu0 0.0
    %801 = vmatpush2.msra.mxu0 0.0
    %802 = vmatprep.subr.mxu0 0.0
    %803 = vmatpush2.msra.mxu0 0.0
    %804 = vmatprep.subr.mxu0 0.0
    %805 = vmatpush2.msra.mxu0 0.0
    %806 = vmatprep.subr.mxu0 0.0
    %807 = vmatpush2.msra.mxu0 0.0
    %808 = vmatprep.subr.mxu0 0.0
    %809 = vmatpush2.msra.mxu0 0.0
    %810 = vmatprep.subr.mxu0 0.0
    %811 = vmatpush2.msra.mxu0 0.0
    %812 = vmatprep.subr.mxu0 0.0
    %813 = vmatpush2.msra.mxu0 0.0
    %814 = vmatprep.subr.mxu0 0.0
    %815 = vmatpush2.msra.mxu0 0.0
    %816 = vmatprep.subr.mxu0 0.0
    %817 = vmatpush2.msra.mxu0 0.0
    %818 = vmatprep.subr.mxu0 0.0
    %819 = vmatpush2.msra.mxu0 0.0
    %820 = vmatprep.subr.mxu0 0.0
    %821 = vmatpush2.msra.mxu0 0.0
    %822 = vmatprep.subr.mxu0 0.0
    %823 = vmatpush2.msra.mxu0 0.0
    %824 = vmatprep.subr.mxu0 0.0
    %825 = vmatpush2.msra.mxu0 0.0
    %826 = vmatprep.subr.mxu0 0.0
    %827 = vmatpush2.msra.mxu0 0.0
    %828 = vmatprep.mubr.f32.mxu0 0.0
    %829 = vmatmul.mubr.f32.gmra.mxu0 %v759
    %v830 = vpop.f32.mrf.mxu0
    %v831 = vadd.f32 %v755, %v830
    %v832 = vpop.f32.mrf.mxu0
    %833 = vdwg.mxu0
    %v835 = vrot.slane %v831, 2
    %v837 = vadd.f32 %v831, %v835
    %v838 = vxor.u32 %v837, 2147483648
    %v839 = vmul.f32 %v838, 1.442695
    %v840 = vpow.pop %v839
    %v841 = vadd.f32 %v840, 1.0
    %v842 = vrcp.pop %v841
    %v843 = vmul.f32 1.0, %v842
    %v844 = vlaneseq
    %v845 = vshrl.u32 %v844, 7
    %v846 = vsub.s32 0, %v845
    %v847 = vrot.slane %v843, %v846
    %849 = vbcast.lane.b32.xlu0 %v847, 256
    %v850 = vpop.permute.xlu0 %849
    %s852 = sor.u32 256, 8
    %853 = vbcast.lane.b32.xlu0 %v847, %s852
    %v854 = vpop.permute.xlu0 %853
    %s856 = sor.u32 256, 16
    %857 = vbcast.lane.b32.xlu0 %v847, %s856
    %v858 = vpop.permute.xlu0 %857
    %s860 = sor.u32 256, 24
    %861 = vbcast.lane.b32.xlu0 %v847, %s860
    %v862 = vpop.permute.xlu0 %861
    %v863 = vlaneseq
    %v864 = vshrl.u32 %v863, 7
    %v865 = vsub.s32 1, %v864
    %v866 = vrot.slane %v843, %v865
    %868 = vbcast.lane.b32.xlu0 %v866, 256
    %v869 = vpop.permute.xlu0 %868
    %s871 = sor.u32 256, 8
    %872 = vbcast.lane.b32.xlu0 %v866, %s871
    %v873 = vpop.permute.xlu0 %872
    %s875 = sor.u32 256, 16
    %876 = vbcast.lane.b32.xlu0 %v866, %s875
    %v877 = vpop.permute.xlu0 %876
    %s879 = sor.u32 256, 24
    %880 = vbcast.lane.b32.xlu0 %v866, %s879
    %v881 = vpop.permute.xlu0 %880
    %v882 = vld [vmem:[#allocation4] sm:$0xff]
    %v883 = vld [vmem:[#allocation4 + $0x40] sm:$0xff]
    %v884 = vld [vmem:[#allocation4 + $0x80] sm:$0xff]
    %v885 = vld [vmem:[#allocation4 + $0xc0] sm:$0xff]
    %v886 = vld [vmem:[#allocation4 + $0x100] sm:$0xff]
    %v887 = vld [vmem:[#allocation4 + $0x140] sm:$0xff]
    %v888 = vld [vmem:[#allocation4 + $0x180] sm:$0xff]
    %v889 = vld [vmem:[#allocation4 + $0x1c0] sm:$0xff]
    %v890 = vmul.f32 %v882, %v850
    %v891 = vmul.f32 %v883, %v854
    %v892 = vmul.f32 %v884, %v858
    %v893 = vmul.f32 %v885, %v862
    %v894 = vmul.f32 %v886, %v869
    %v895 = vmul.f32 %v887, %v873
    %v896 = vmul.f32 %v888, %v877
    %v897 = vmul.f32 %v889, %v881
    %898 = vst [vmem:[#allocation7] sm:$0xff] %v890
    %899 = vst [vmem:[#allocation7 + $0x40] sm:$0xff] %v891
    %900 = vst [vmem:[#allocation7 + $0x80] sm:$0xff] %v892
    %901 = vst [vmem:[#allocation7 + $0xc0] sm:$0xff] %v893
    %902 = vst [vmem:[#allocation7 + $0x100] sm:$0xff] %v894
    %903 = vst [vmem:[#allocation7 + $0x140] sm:$0xff] %v895
    %904 = vst [vmem:[#allocation7 + $0x180] sm:$0xff] %v896
    %905 = vst [vmem:[#allocation7 + $0x1c0] sm:$0xff] %v897
    %v906 = vld [vmem:[#allocation4 + $0x8] sm:$0xff]
    %v907 = vld [vmem:[#allocation4 + $0x48] sm:$0xff]
    %v908 = vld [vmem:[#allocation4 + $0x88] sm:$0xff]
    %v909 = vld [vmem:[#allocation4 + $0xc8] sm:$0xff]
    %v910 = vld [vmem:[#allocation4 + $0x108] sm:$0xff]
    %v911 = vld [vmem:[#allocation4 + $0x148] sm:$0xff]
    %v912 = vld [vmem:[#allocation4 + $0x188] sm:$0xff]
    %v913 = vld [vmem:[#allocation4 + $0x1c8] sm:$0xff]
    %v914 = vmul.f32 %v906, %v850
    %v915 = vmul.f32 %v907, %v854
    %v916 = vmul.f32 %v908, %v858
    %v917 = vmul.f32 %v909, %v862
    %v918 = vmul.f32 %v910, %v869
    %v919 = vmul.f32 %v911, %v873
    %v920 = vmul.f32 %v912, %v877
    %v921 = vmul.f32 %v913, %v881
    %922 = vst [vmem:[#allocation7 + $0x8] sm:$0xff] %v914
    %923 = vst [vmem:[#allocation7 + $0x48] sm:$0xff] %v915
    %924 = vst [vmem:[#allocation7 + $0x88] sm:$0xff] %v916
    %925 = vst [vmem:[#allocation7 + $0xc8] sm:$0xff] %v917
    %926 = vst [vmem:[#allocation7 + $0x108] sm:$0xff] %v918
    %927 = vst [vmem:[#allocation7 + $0x148] sm:$0xff] %v919
    %928 = vst [vmem:[#allocation7 + $0x188] sm:$0xff] %v920
    %929 = vst [vmem:[#allocation7 + $0x1c8] sm:$0xff] %v921
    %v930 = vld [vmem:[#allocation4 + $0x10] sm:$0xff]
    %v931 = vld [vmem:[#allocation4 + $0x50] sm:$0xff]
    %v932 = vld [vmem:[#allocation4 + $0x90] sm:$0xff]
    %v933 = vld [vmem:[#allocation4 + $0xd0] sm:$0xff]
    %v934 = vld [vmem:[#allocation4 + $0x110] sm:$0xff]
    %v935 = vld [vmem:[#allocation4 + $0x150] sm:$0xff]
    %v936 = vld [vmem:[#allocation4 + $0x190] sm:$0xff]
    %v937 = vld [vmem:[#allocation4 + $0x1d0] sm:$0xff]
    %v938 = vmul.f32 %v930, %v850
    %v939 = vmul.f32 %v931, %v854
    %v940 = vmul.f32 %v932, %v858
    %v941 = vmul.f32 %v933, %v862
    %v942 = vmul.f32 %v934, %v869
    %v943 = vmul.f32 %v935, %v873
    %v944 = vmul.f32 %v936, %v877
    %v945 = vmul.f32 %v937, %v881
    %946 = vst [vmem:[#allocation7 + $0x10] sm:$0xff] %v938
    %947 = vst [vmem:[#allocation7 + $0x50] sm:$0xff] %v939
    %948 = vst [vmem:[#allocation7 + $0x90] sm:$0xff] %v940
    %949 = vst [vmem:[#allocation7 + $0xd0] sm:$0xff] %v941
    %950 = vst [vmem:[#allocation7 + $0x110] sm:$0xff] %v942
    %951 = vst [vmem:[#allocation7 + $0x150] sm:$0xff] %v943
    %952 = vst [vmem:[#allocation7 + $0x190] sm:$0xff] %v944
    %953 = vst [vmem:[#allocation7 + $0x1d0] sm:$0xff] %v945
    %v954 = vld [vmem:[#allocation4 + $0x18] sm:$0xff]
    %v955 = vld [vmem:[#allocation4 + $0x58] sm:$0xff]
    %v956 = vld [vmem:[#allocation4 + $0x98] sm:$0xff]
    %v957 = vld [vmem:[#allocation4 + $0xd8] sm:$0xff]
    %v958 = vld [vmem:[#allocation4 + $0x118] sm:$0xff]
    %v959 = vld [vmem:[#allocation4 + $0x158] sm:$0xff]
    %v960 = vld [vmem:[#allocation4 + $0x198] sm:$0xff]
    %v961 = vld [vmem:[#allocation4 + $0x1d8] sm:$0xff]
    %v962 = vmul.f32 %v954, %v850
    %v963 = vmul.f32 %v955, %v854
    %v964 = vmul.f32 %v956, %v858
    %v965 = vmul.f32 %v957, %v862
    %v966 = vmul.f32 %v958, %v869
    %v967 = vmul.f32 %v959, %v873
    %v968 = vmul.f32 %v960, %v877
    %v969 = vmul.f32 %v961, %v881
    %970 = vst [vmem:[#allocation7 + $0x18] sm:$0xff] %v962
    %971 = vst [vmem:[#allocation7 + $0x58] sm:$0xff] %v963
    %972 = vst [vmem:[#allocation7 + $0x98] sm:$0xff] %v964
    %973 = vst [vmem:[#allocation7 + $0xd8] sm:$0xff] %v965
    %974 = vst [vmem:[#allocation7 + $0x118] sm:$0xff] %v966
    %975 = vst [vmem:[#allocation7 + $0x158] sm:$0xff] %v967
    %976 = vst [vmem:[#allocation7 + $0x198] sm:$0xff] %v968
    %977 = vst [vmem:[#allocation7 + $0x1d8] sm:$0xff] %v969
    %v978 = vld [vmem:[#allocation4 + $0x20] sm:$0xff]
    %v979 = vld [vmem:[#allocation4 + $0x60] sm:$0xff]
    %v980 = vld [vmem:[#allocation4 + $0xa0] sm:$0xff]
    %v981 = vld [vmem:[#allocation4 + $0xe0] sm:$0xff]
    %v982 = vld [vmem:[#allocation4 + $0x120] sm:$0xff]
    %v983 = vld [vmem:[#allocation4 + $0x160] sm:$0xff]
    %v984 = vld [vmem:[#allocation4 + $0x1a0] sm:$0xff]
    %v985 = vld [vmem:[#allocation4 + $0x1e0] sm:$0xff]
    %v986 = vmul.f32 %v978, %v850
    %v987 = vmul.f32 %v979, %v854
    %v988 = vmul.f32 %v980, %v858
    %v989 = vmul.f32 %v981, %v862
    %v990 = vmul.f32 %v982, %v869
    %v991 = vmul.f32 %v983, %v873
    %v992 = vmul.f32 %v984, %v877
    %v993 = vmul.f32 %v985, %v881
    %994 = vst [vmem:[#allocation7 + $0x20] sm:$0xff] %v986
    %995 = vst [vmem:[#allocation7 + $0x60] sm:$0xff] %v987
    %996 = vst [vmem:[#allocation7 + $0xa0] sm:$0xff] %v988
    %997 = vst [vmem:[#allocation7 + $0xe0] sm:$0xff] %v989
    %998 = vst [vmem:[#allocation7 + $0x120] sm:$0xff] %v990
    %999 = vst [vmem:[#allocation7 + $0x160] sm:$0xff] %v991
    %1000 = vst [vmem:[#allocation7 + $0x1a0] sm:$0xff] %v992
    %1001 = vst [vmem:[#allocation7 + $0x1e0] sm:$0xff] %v993
    %v1002 = vld [vmem:[#allocation4 + $0x28] sm:$0xff]
    %v1003 = vld [vmem:[#allocation4 + $0x68] sm:$0xff]
    %v1004 = vld [vmem:[#allocation4 + $0xa8] sm:$0xff]
    %v1005 = vld [vmem:[#allocation4 + $0xe8] sm:$0xff]
    %v1006 = vld [vmem:[#allocation4 + $0x128] sm:$0xff]
    %v1007 = vld [vmem:[#allocation4 + $0x168] sm:$0xff]
    %v1008 = vld [vmem:[#allocation4 + $0x1a8] sm:$0xff]
    %v1009 = vld [vmem:[#allocation4 + $0x1e8] sm:$0xff]
    %v1010 = vmul.f32 %v1002, %v850
    %v1011 = vmul.f32 %v1003, %v854
    %v1012 = vmul.f32 %v1004, %v858
    %v1013 = vmul.f32 %v1005, %v862
    %v1014 = vmul.f32 %v1006, %v869
    %v1015 = vmul.f32 %v1007, %v873
    %v1016 = vmul.f32 %v1008, %v877
    %v1017 = vmul.f32 %v1009, %v881
    %1018 = vst [vmem:[#allocation7 + $0x28] sm:$0xff] %v1010
    %1019 = vst [vmem:[#allocation7 + $0x68] sm:$0xff] %v1011
    %1020 = vst [vmem:[#allocation7 + $0xa8] sm:$0xff] %v1012
    %1021 = vst [vmem:[#allocation7 + $0xe8] sm:$0xff] %v1013
    %1022 = vst [vmem:[#allocation7 + $0x128] sm:$0xff] %v1014
    %1023 = vst [vmem:[#allocation7 + $0x168] sm:$0xff] %v1015
    %1024 = vst [vmem:[#allocation7 + $0x1a8] sm:$0xff] %v1016
    %1025 = vst [vmem:[#allocation7 + $0x1e8] sm:$0xff] %v1017
    %v1026 = vld [vmem:[#allocation4 + $0x30] sm:$0xff]
    %v1027 = vld [vmem:[#allocation4 + $0x70] sm:$0xff]
    %v1028 = vld [vmem:[#allocation4 + $0xb0] sm:$0xff]
    %v1029 = vld [vmem:[#allocation4 + $0xf0] sm:$0xff]
    %v1030 = vld [vmem:[#allocation4 + $0x130] sm:$0xff]
    %v1031 = vld [vmem:[#allocation4 + $0x170] sm:$0xff]
    %v1032 = vld [vmem:[#allocation4 + $0x1b0] sm:$0xff]
    %v1033 = vld [vmem:[#allocation4 + $0x1f0] sm:$0xff]
    %v1034 = vmul.f32 %v1026, %v850
    %v1035 = vmul.f32 %v1027, %v854
    %v1036 = vmul.f32 %v1028, %v858
    %v1037 = vmul.f32 %v1029, %v862
    %v1038 = vmul.f32 %v1030, %v869
    %v1039 = vmul.f32 %v1031, %v873
    %v1040 = vmul.f32 %v1032, %v877
    %v1041 = vmul.f32 %v1033, %v881
    %1042 = vst [vmem:[#allocation7 + $0x30] sm:$0xff] %v1034
    %1043 = vst [vmem:[#allocation7 + $0x70] sm:$0xff] %v1035
    %1044 = vst [vmem:[#allocation7 + $0xb0] sm:$0xff] %v1036
    %1045 = vst [vmem:[#allocation7 + $0xf0] sm:$0xff] %v1037
    %1046 = vst [vmem:[#allocation7 + $0x130] sm:$0xff] %v1038
    %1047 = vst [vmem:[#allocation7 + $0x170] sm:$0xff] %v1039
    %1048 = vst [vmem:[#allocation7 + $0x1b0] sm:$0xff] %v1040
    %1049 = vst [vmem:[#allocation7 + $0x1f0] sm:$0xff] %v1041
    %v1050 = vld [vmem:[#allocation4 + $0x38] sm:$0xff]
    %v1051 = vld [vmem:[#allocation4 + $0x78] sm:$0xff]
    %v1052 = vld [vmem:[#allocation4 + $0xb8] sm:$0xff]
    %v1053 = vld [vmem:[#allocation4 + $0xf8] sm:$0xff]
    %v1054 = vld [vmem:[#allocation4 + $0x138] sm:$0xff]
    %v1055 = vld [vmem:[#allocation4 + $0x178] sm:$0xff]
    %v1056 = vld [vmem:[#allocation4 + $0x1b8] sm:$0xff]
    %v1057 = vld [vmem:[#allocation4 + $0x1f8] sm:$0xff]
    %v1058 = vmul.f32 %v1050, %v850
    %v1059 = vmul.f32 %v1051, %v854
    %v1060 = vmul.f32 %v1052, %v858
    %v1061 = vmul.f32 %v1053, %v862
    %v1062 = vmul.f32 %v1054, %v869
    %v1063 = vmul.f32 %v1055, %v873
    %v1064 = vmul.f32 %v1056, %v877
    %v1065 = vmul.f32 %v1057, %v881
    %1066 = vst [vmem:[#allocation7 + $0x38] sm:$0xff] %v1058
    %1067 = vst [vmem:[#allocation7 + $0x78] sm:$0xff] %v1059
    %1068 = vst [vmem:[#allocation7 + $0xb8] sm:$0xff] %v1060
    %1069 = vst [vmem:[#allocation7 + $0xf8] sm:$0xff] %v1061
    %1070 = vst [vmem:[#allocation7 + $0x138] sm:$0xff] %v1062
    %1071 = vst [vmem:[#allocation7 + $0x178] sm:$0xff] %v1063
    %1072 = vst [vmem:[#allocation7 + $0x1b8] sm:$0xff] %v1064
    %1073 = vst [vmem:[#allocation7 + $0x1f8] sm:$0xff] %v1065
    // Predicated region
    $region26: #{tpu_custom_call.1} parent=1 // pred_check
      _
    $region27: #{tpu_custom_call.1} parent=1 // pred_check_branch
      %1075 = sbr.rel (0) target = $region29
    $region28: #{tpu_custom_call.1} parent=1 // pred_region
      %s1077 = ssub.s32 8192, 8192
      %1078 = vsyncadd [#allocation6], %s1077
      %s1079 = sshll.u32 [#allocation7], 4
      %s1080 = int_to_ptr.vmem [resolvable:$true] %s1079
      %1085 = dma.vmem_to_hbm [thread:$0]  %s1080, 8192, %s5, [#allocation6], 1024, 1024, 64
    $region29: #{tpu_custom_call.1} parent=1 // pred_fallthru
      _
    // Predicated region
    $region30: #{tpu_custom_call.1} parent=1 // pred_check
      _
    $region31: #{tpu_custom_call.1} parent=1 // pred_check_branch
      %1087 = sbr.rel (0) target = $region33
    $region32: #{tpu_custom_call.1} parent=1 // pred_region
      %1088 = dma.done [#allocation6], 8192
    $region33: #{tpu_custom_call.1} parent=1 // pred_fallthru
      _
    %1089 = vsyncpa [#allocation5], 1
    %1090 = vsyncpa [#allocation6], 1

</llo_original>
